<compile_context>
chip_gen: v7x
topology: tpu7x:2x2x1
jax: 0.10.0
libtpu: 0.0.40
codegen_flags: <defaults>
</compile_context>

<pallas_src>
import functools

import jax
import jax.numpy as jnp
from jax import lax
from jax.experimental import pallas as pl
from jax.experimental.pallas import tpu as pltpu

LANE = 128
LHALO = 8          # left halo width; keeps the interior store sublane-aligned


def _round_up(x, m):
    return (x + m - 1) // m * m


def _sds(start, size, stride):
    """pl.ds that only passes a stride when it is > 1."""
    return pl.ds(start, size) if stride == 1 else pl.ds(start, size, stride=stride)


def _default_dw_dtype():
    """bf16 depthwise math only on chips with a bf16 VPU (v6e / v7x)."""
    try:
        kind = jax.devices()[0].device_kind.lower()
    except Exception:
        return jnp.float32
    if any(tag in kind for tag in ("v6", "v7", "7x", "trillium")):
        return jnp.bfloat16
    return jnp.float32


def _pick_images_per_step(n, ho, wo, cmid_p):
    """Largest divisor of n such that the f32 depthwise accumulator stays
    within ~half the 64-vreg file (so the static 9-tap loop doesn't spill)."""
    acc_bytes_per_image = ho * wo * cmid_p * 4
    cap = max(1, min(8, (32 * 4096) // max(1, acc_bytes_per_image)))
    nb = 1
    for d in range(1, min(n, cap) + 1):
        if n % d == 0:
            nb = d
    return nb


def _linear_bottleneck_kernel(
    x_ref,      # (NB, H*W, Cin)     f32  input activations, channels UNPADDED
    w1_ref,     # (Cin_p, Cmid_p)    bf16 1x1 expansion weight, BN1 scale folded
    sh1_ref,    # (1, Cmid_p)        f32  BN1 shift
    wdw_ref,    # (9, Cmid_p)        dw   3x3 dw weight (tap-major), BN2 scale folded
    sh2_ref,    # (1, Cmid_p)        f32  BN2 shift
    w3_ref,     # (Cmid_p, Cout_p)   bf16 1x1 projection weight, BN3 scale folded
    sh3_ref,    # (1, Cout_p)        f32  BN3 shift
    o_ref,      # (NB, Ho*Wo, Cout)  output, channels UNPADDED
    xpad_ref,   # VMEM scratch (NB*H*W, Cin_p) f32 : lane-pad staging for x
    pad_ref,    # VMEM scratch (NB, H+2, Wp, Cmid_p) dw_dtype : zero-halo image
    *,
    NB, H, W, Ho, Wo, Cin, Cout, stride, use_shortcut, dw_dtype,
):
    Cin_p = w1_ref.shape[0]
    C = w1_ref.shape[1]                     # Cmid_p (lane-padded)
    Wp = pad_ref.shape[2]
    M = NB * H * W

    # ---- load input block; lane-pad to Cin_p inside the kernel so the HBM ----
    # ---- stream stays unpadded (no wrapper-side pad round trip)          ----
    x = x_ref[...]                          # (NB, H*W, Cin) f32
    x2d = x.reshape(M, Cin)
    if Cin == Cin_p:
        xb = x2d.astype(jnp.bfloat16)
    else:
        xpad_ref[...] = jnp.zeros(xpad_ref.shape, jnp.float32)
        xpad_ref[:, :Cin] = x2d             # masked store of the real lanes
        xb = xpad_ref[...].astype(jnp.bfloat16)   # (M, Cin_p) bf16

    # ---- stage 1: 1x1 expansion conv (bf16 MXU, f32 acc) + shift + ReLU ----
    h = jnp.dot(xb, w1_ref[...], preferred_element_type=jnp.float32)
    h = jnp.maximum(h + sh1_ref[...], 0.0)            # (M, Cmid_p) f32
    h = h.astype(dw_dtype)

    # ---- stage 2: 3x3 depthwise conv (stride, pad=1) + shift + ReLU ----
    # Scratch column layout per image row:
    #   [0 .. LHALO-1] left halo (only column LHALO-1 is read)
    #   [LHALO .. LHALO+W-1] interior  (store starts at sublane 8 -> aligned)
    #   [LHALO+W] right halo column; rest is padding to Wp (never read).
    # Halos are re-zeroed every step so the kernel stays correct when the
    # batch axis is sharded across TensorCores (per-core scratch is private).
    zero_row = jnp.zeros((NB, 1, Wp, C), dw_dtype)
    pad_ref[:, 0:1, :, :] = zero_row
    pad_ref[:, H + 1:H + 2, :, :] = zero_row
    zero_col = jnp.zeros((NB, H, 1, C), dw_dtype)
    pad_ref[:, 1:H + 1, LHALO - 1:LHALO, :] = zero_col
    pad_ref[:, 1:H + 1, LHALO + W:LHALO + W + 1, :] = zero_col
    pad_ref[:, 1:H + 1, LHALO:LHALO + W, :] = h.reshape(NB, H, W, C)  # aligned

    wdw = wdw_ref[...]                                 # (9, Cmid_p) dw_dtype
    acc = jnp.zeros((NB, Ho, Wo, C), jnp.float32)
    for di in range(3):
        for dj in range(3):
            tap = pad_ref[:, _sds(di, Ho, stride),
                          _sds(LHALO - 1 + dj, Wo, stride), :]
            acc = acc + (tap * wdw[3 * di + dj][None, None, None, :]
                         ).astype(jnp.float32)
    d = acc.reshape(NB * Ho * Wo, C)
    d = jnp.maximum(d + sh2_ref[...], 0.0)             # (NB*Ho*Wo, Cmid_p) f32

    # ---- stage 3: 1x1 projection conv (bf16 MXU) + shift + optional shortcut ----
    out = jnp.dot(d.astype(jnp.bfloat16), w3_ref[...],
                  preferred_element_type=jnp.float32)
    out = out + sh3_ref[...]
    out = out[:, :Cout]                                # drop lane padding pre-store
    if use_shortcut:          # only when stride == 1 and Cin == Cout
        out = out + x2d                                # exact f32 residual
    o_ref[...] = out.reshape(NB, Ho * Wo, Cout).astype(o_ref.dtype)


def pack_kernel_params(params):
    """Fold BN scales into weights, lane-pad channels, cast matmul weights to bf16."""
    Cin, Cmid = params["w1"].shape
    Cout = params["w3"].shape[1]
    Cin_p, Cmid_p, Cout_p = (_round_up(c, LANE) for c in (Cin, Cmid, Cout))

    def pad_to(a, axis, target):
        pw = [(0, 0)] * a.ndim
        pw[axis] = (0, target - a.shape[axis])
        return jnp.pad(a, pw)

    w1 = pad_to(pad_to(params["w1"] * params["sc1"], 1, Cmid_p), 0, Cin_p)
    wdw = pad_to(params["wdw"] * params["sc2"], 1, Cmid_p)
    w3 = pad_to(pad_to(params["w3"] * params["sc3"], 1, Cout_p), 0, Cmid_p)

    return dict(
        w1=w1.astype(jnp.bfloat16),
        sh1=pad_to(params["sh1"], 1, Cmid_p).astype(jnp.float32),
        wdw=wdw.astype(jnp.float32),
        sh2=pad_to(params["sh2"], 1, Cmid_p).astype(jnp.float32),
        w3=w3.astype(jnp.bfloat16),
        sh3=pad_to(params["sh3"], 1, Cout_p).astype(jnp.float32),
        cin=Cin, cmid=Cmid, cout=Cout,
        cin_p=Cin_p, cmid_p=Cmid_p, cout_p=Cout_p,
    )


def linear_bottleneck_forward_nhwc(x_nhwc, kp, *, stride, images_per_step=None,
                                   out_dtype=jnp.float32, dw_dtype=None):
    """Pallas LinearBottleneck forward, NHWC in / NHWC out (preferred layout)."""
    N, H, W, Cin = x_nhwc.shape
    assert Cin == kp["cin"]
    Cin_p, Cmid_p, Cout_p = kp["cin_p"], kp["cmid_p"], kp["cout_p"]
    Cout = kp["cout"]
    Ho = (H + 2 - 3) // stride + 1
    Wo = (W + 2 - 3) // stride + 1
    use_shortcut = (stride == 1) and (Cin == Cout)
    assert (H * W) % 8 == 0 and (Ho * Wo) % 8 == 0, \
        "flattened spatial extents must be multiples of 8 (sublane alignment)"

    if dw_dtype is None:
        dw_dtype = _default_dw_dtype()
    NB = images_per_step or _pick_images_per_step(N, Ho, Wo, Cmid_p)
    assert N % NB == 0, (N, NB)
    Wp = _round_up(W + LHALO + 1, 8)    # 8-col left halo + interior + right halo

    # Activations stay channel-UNPADDED in HBM (lane-pad happens in-kernel).
    x_flat = x_nhwc.astype(jnp.float32).reshape(N, H * W, Cin)
    wdw = kp["wdw"].astype(dw_dtype)

    kernel = functools.partial(
        _linear_bottleneck_kernel,
        NB=NB, H=H, W=W, Ho=Ho, Wo=Wo, Cin=Cin, Cout=Cout,
        stride=stride, use_shortcut=use_shortcut, dw_dtype=dw_dtype)

    out_flat = pl.pallas_call(
        kernel,
        out_shape=jax.ShapeDtypeStruct((N, Ho * Wo, Cout), out_dtype),
        grid_spec=pltpu.PrefetchScalarGridSpec(
            num_scalar_prefetch=0,
            grid=(N // NB,),
            in_specs=[
                pl.BlockSpec((NB, H * W, Cin), lambda n: (n, 0, 0)),
                pl.BlockSpec((Cin_p, Cmid_p), lambda n: (0, 0)),
                pl.BlockSpec((1, Cmid_p), lambda n: (0, 0)),
                pl.BlockSpec((9, Cmid_p), lambda n: (0, 0)),
                pl.BlockSpec((1, Cmid_p), lambda n: (0, 0)),
                pl.BlockSpec((Cmid_p, Cout_p), lambda n: (0, 0)),
                pl.BlockSpec((1, Cout_p), lambda n: (0, 0)),
            ],
            out_specs=pl.BlockSpec((NB, Ho * Wo, Cout), lambda n: (n, 0, 0)),
            scratch_shapes=[
                pltpu.VMEM((NB * H * W, Cin_p), jnp.float32),
                pltpu.VMEM((NB, H + 2, Wp, Cmid_p), dw_dtype),
            ],
        ),
        compiler_params=pltpu.CompilerParams(
            dimension_semantics=("parallel",),        # megacore over batch blocks
            vmem_limit_bytes=32 * 1024 * 1024),
    )(x_flat, kp["w1"], kp["sh1"], wdw, kp["sh2"], kp["w3"], kp["sh3"])

    return out_flat.reshape(N, Ho, Wo, Cout)


def linear_bottleneck_forward(x_nchw, kp, *, stride, **kw):
    """NCHW-compat wrapper matching the PyTorch module's layout.

    Production use should stay NHWC end-to-end (call
    linear_bottleneck_forward_nhwc) and skip these boundary transposes.
    """
    x_nhwc = jnp.transpose(x_nchw, (0, 2, 3, 1))
    out = linear_bottleneck_forward_nhwc(x_nhwc, kp, stride=stride, **kw)
    return jnp.transpose(out, (0, 3, 1, 2))


def make_params(key, in_channels, out_channels, t):
    """Deterministic synthetic parameters (Conv weights + folded BN affine)."""
    Cmid = in_channels * t
    eps = 1e-5
    ks = jax.random.split(key, 15)

    def bn_fold(kg, kb, km, kv, c):
        gamma = 1.0 + 0.1 * jax.random.normal(kg, (c,), jnp.float32)
        beta = 0.1 * jax.random.normal(kb, (c,), jnp.float32)
        mean = 0.1 * jax.random.normal(km, (c,), jnp.float32)
        var = 1.0 + 0.1 * jax.random.uniform(kv, (c,), jnp.float32)
        scale = gamma * lax.rsqrt(var + eps)
        shift = beta - mean * scale
        return scale[None, :], shift[None, :]

    w1 = 0.1 * jax.random.normal(ks[0], (in_channels, Cmid), jnp.float32)
    sc1, sh1 = bn_fold(ks[1], ks[2], ks[3], ks[4], Cmid)
    wdw3 = 0.1 * jax.random.normal(ks[5], (3, 3, Cmid), jnp.float32)
    sc2, sh2 = bn_fold(ks[6], ks[7], ks[8], ks[9], Cmid)
    w3 = 0.1 * jax.random.normal(ks[10], (Cmid, out_channels), jnp.float32)
    sc3, sh3 = bn_fold(ks[11], ks[12], ks[13], ks[14], out_channels)

    return dict(w1=w1, sc1=sc1, sh1=sh1,
                wdw=wdw3.reshape(9, Cmid), wdw3=wdw3, sc2=sc2, sh2=sh2,
                w3=w3, sc3=sc3, sh3=sh3)


def linear_bottleneck_reference(x_nchw, params, *, stride):
    """Pure-JAX reference using lax.conv, for numerical validation."""
    x = jnp.transpose(x_nchw, (0, 2, 3, 1))  # NHWC
    _, _, _, Cin = x.shape
    Cout = params["w3"].shape[1]
    hi = lax.Precision.HIGHEST
    dn = ("NHWC", "HWIO", "NHWC")

    h = lax.conv_general_dilated(
        x, params["w1"][None, None, :, :], (1, 1), "VALID",
        dimension_numbers=dn, precision=hi)
    h = jax.nn.relu(h * params["sc1"][0] + params["sh1"][0])

    Cmid = h.shape[-1]
    d = lax.conv_general_dilated(
        h, params["wdw3"][:, :, None, :], (stride, stride), ((1, 1), (1, 1)),
        dimension_numbers=dn, feature_group_count=Cmid, precision=hi)
    d = jax.nn.relu(d * params["sc2"][0] + params["sh2"][0])

    out = lax.conv_general_dilated(
        d, params["w3"][None, None, :, :], (1, 1), "VALID",
        dimension_numbers=dn, precision=hi)
    out = out * params["sc3"][0] + params["sh3"][0]
    if stride == 1 and Cin == Cout:
        out = out + x
    return jnp.transpose(out, (0, 3, 1, 2))


if __name__ == "__main__":
    # LinearBottleneck(in_channels=4, out_channels=12, t=6, stride=2)
    N, Cin, H, W = 2, 4, 16, 16
    t, stride, Cout = 6, 2, 12

    key = jax.random.PRNGKey(0)
    kx, kp_key = jax.random.split(key)
    x = jax.random.normal(kx, (N, Cin, H, W), jnp.float32)
    params = make_params(kp_key, Cin, Cout, t)
    kparams = pack_kernel_params(params)

    out = linear_bottleneck_forward(x, kparams, stride=stride)
    out = jax.block_until_ready(out)

    Ho = (H + 2 - 3) // stride + 1
    Wo = (W + 2 - 3) // stride + 1
    assert out.shape == (N, Cout, Ho, Wo), out.shape

    ref = linear_bottleneck_reference(x, params, stride=stride)
    max_err = float(jnp.max(jnp.abs(out - ref)))
    assert max_err < 5e-2, f"mismatch vs reference: max_err={max_err}"

    print("KERNEL_OK")
</pallas_src>

<mosaic_0001>
module attributes {stable_mosaic.version = 11 : i64} {
  func.func @_linear_bottleneck_kernel(%arg0: i32, %arg1: memref<2x256x4xf32, #tpu.memory_space<vmem>>, %arg2: memref<128x128xbf16, #tpu.memory_space<vmem>>, %arg3: memref<1x128xf32, #tpu.memory_space<vmem>>, %arg4: memref<9x128xf32, #tpu.memory_space<vmem>>, %arg5: memref<1x128xf32, #tpu.memory_space<vmem>>, %arg6: memref<128x128xbf16, #tpu.memory_space<vmem>>, %arg7: memref<1x128xf32, #tpu.memory_space<vmem>>, %arg8: memref<2x64x12xf32, #tpu.memory_space<vmem>>, %arg9: memref<512x128xf32, #tpu.memory_space<vmem>>, %arg10: memref<2x18x32x128xf32, #tpu.memory_space<vmem>>) attributes {dimension_semantics = [#tpu.dimension_semantics<parallel>], iteration_bounds = array<i64: 1>, scalar_prefetch = 0 : i64, scratch_operands = 2 : i64, tpu.core_type = #tpu.core_type<tc>, window_params = [{transform_indices = @transform_0, window_bounds = array<i64: 2, 256, 4>}, {pipeline_mode = #tpu.pipeline_mode<synchronous>, transform_indices = @transform_1, window_bounds = array<i64: 128, 128>}, {pipeline_mode = #tpu.pipeline_mode<synchronous>, transform_indices = @transform_2, window_bounds = array<i64: 1, 128>}, {pipeline_mode = #tpu.pipeline_mode<synchronous>, transform_indices = @transform_3, window_bounds = array<i64: 9, 128>}, {pipeline_mode = #tpu.pipeline_mode<synchronous>, transform_indices = @transform_4, window_bounds = array<i64: 1, 128>}, {pipeline_mode = #tpu.pipeline_mode<synchronous>, transform_indices = @transform_5, window_bounds = array<i64: 128, 128>}, {pipeline_mode = #tpu.pipeline_mode<synchronous>, transform_indices = @transform_6, window_bounds = array<i64: 1, 128>}, {transform_indices = @transform_7, window_bounds = array<i64: 2, 64, 12>}]} {
    %c0 = arith.constant 0 : index
    %c0_0 = arith.constant 0 : index
    %c0_1 = arith.constant 0 : index
    %0 = vector.load %arg1[%c0, %c0_0, %c0_1] : memref<2x256x4xf32, #tpu.memory_space<vmem>>, vector<2x256x4xf32>
    %1 = vector.shape_cast %0 : vector<2x256x4xf32> to vector<512x4xf32>
    %cst = arith.constant 0.000000e+00 : f32
    %2 = vector.broadcast %cst : f32 to vector<512x128xf32>
    %c0_2 = arith.constant 0 : index
    %c0_3 = arith.constant 0 : index
    %3 = vector.load %arg9[%c0_2, %c0_3] : memref<512x128xf32, #tpu.memory_space<vmem>>, vector<512x128xf32>
    tpu.vector_store %arg9[%c0_2, %c0_3], %2 {strides = array<i32>} : memref<512x128xf32, #tpu.memory_space<vmem>>, vector<512x128xf32>,
    %c0_4 = arith.constant 0 : index
    %c0_5 = arith.constant 0 : index
    %4 = vector.load %arg9[%c0_4, %c0_5] : memref<512x128xf32, #tpu.memory_space<vmem>>, vector<512x4xf32>
    tpu.vector_store %arg9[%c0_4, %c0_5], %1 {strides = array<i32>} : memref<512x128xf32, #tpu.memory_space<vmem>>, vector<512x4xf32>,
    %c0_6 = arith.constant 0 : index
    %c0_7 = arith.constant 0 : index
    %5 = vector.load %arg9[%c0_6, %c0_7] : memref<512x128xf32, #tpu.memory_space<vmem>>, vector<512x128xf32>
    %6 = arith.truncf %5 : vector<512x128xf32> to vector<512x128xbf16>
    %c0_8 = arith.constant 0 : index
    %c0_9 = arith.constant 0 : index
    %7 = vector.load %arg2[%c0_8, %c0_9] : memref<128x128xbf16, #tpu.memory_space<vmem>>, vector<128x128xbf16>
    %cst_10 = arith.constant dense<0.000000e+00> : vector<512x128xf32>
    %8 = tpu.matmul %6, %7, %cst_10 {dimension_numbers = #tpu.dot_dimension_numbers<[1], [0], [0], [1], [0, 0, 1, 1], [], []>} : vector<512x128xbf16>, vector<128x128xbf16>, vector<512x128xf32> -> vector<512x128xf32>
    %c0_11 = arith.constant 0 : index
    %c0_12 = arith.constant 0 : index
    %9 = vector.load %arg3[%c0_11, %c0_12] : memref<1x128xf32, #tpu.memory_space<vmem>>, vector<1x128xf32>
    %10 = vector.broadcast %9 : vector<1x128xf32> to vector<512x128xf32>
    %11 = arith.addf %8, %10 : vector<512x128xf32>
    %cst_13 = arith.constant 0.000000e+00 : f32
    %12 = vector.broadcast %cst_13 : f32 to vector<512x128xf32>
    %13 = arith.maximumf %11, %12 : vector<512x128xf32>
    %cst_14 = arith.constant 0.000000e+00 : f32
    %14 = vector.broadcast %cst_14 : f32 to vector<2x1x32x128xf32>
    %c0_15 = arith.constant 0 : index
    %c0_16 = arith.constant 0 : index
    %c0_17 = arith.constant 0 : index
    %c0_18 = arith.constant 0 : index
    %15 = vector.load %arg10[%c0_15, %c0_16, %c0_17, %c0_18] : memref<2x18x32x128xf32, #tpu.memory_space<vmem>>, vector<2x1x32x128xf32>
    tpu.vector_store %arg10[%c0_15, %c0_16, %c0_17, %c0_18], %14 {strides = array<i32>} : memref<2x18x32x128xf32, #tpu.memory_space<vmem>>, vector<2x1x32x128xf32>,
    %c0_19 = arith.constant 0 : index
    %c17 = arith.constant 17 : index
    %c0_20 = arith.constant 0 : index
    %c0_21 = arith.constant 0 : index
    %16 = vector.load %arg10[%c0_19, %c17, %c0_20, %c0_21] : memref<2x18x32x128xf32, #tpu.memory_space<vmem>>, vector<2x1x32x128xf32>
    tpu.vector_store %arg10[%c0_19, %c17, %c0_20, %c0_21], %14 {strides = array<i32>} : memref<2x18x32x128xf32, #tpu.memory_space<vmem>>, vector<2x1x32x128xf32>,
    %cst_22 = arith.constant 0.000000e+00 : f32
    %17 = vector.broadcast %cst_22 : f32 to vector<2x16x1x128xf32>
    %c0_23 = arith.constant 0 : index
    %c1 = arith.constant 1 : index
    %c7 = arith.constant 7 : index
    %c0_24 = arith.constant 0 : index
    %18 = vector.load %arg10[%c0_23, %c1, %c7, %c0_24] : memref<2x18x32x128xf32, #tpu.memory_space<vmem>>, vector<2x16x1x128xf32>
    tpu.vector_store %arg10[%c0_23, %c1, %c7, %c0_24], %17 {strides = array<i32>} : memref<2x18x32x128xf32, #tpu.memory_space<vmem>>, vector<2x16x1x128xf32>,
    %c0_25 = arith.constant 0 : index
    %c1_26 = arith.constant 1 : index
    %c24 = arith.constant 24 : index
    %c0_27 = arith.constant 0 : index
    %19 = vector.load %arg10[%c0_25, %c1_26, %c24, %c0_27] : memref<2x18x32x128xf32, #tpu.memory_space<vmem>>, vector<2x16x1x128xf32>
    tpu.vector_store %arg10[%c0_25, %c1_26, %c24, %c0_27], %17 {strides = array<i32>} : memref<2x18x32x128xf32, #tpu.memory_space<vmem>>, vector<2x16x1x128xf32>,
    %20 = vector.shape_cast %13 : vector<512x128xf32> to vector<2x16x16x128xf32>
    %c0_28 = arith.constant 0 : index
    %c1_29 = arith.constant 1 : index
    %c8 = arith.constant 8 : index
    %c0_30 = arith.constant 0 : index
    %21 = vector.load %arg10[%c0_28, %c1_29, %c8, %c0_30] : memref<2x18x32x128xf32, #tpu.memory_space<vmem>>, vector<2x16x16x128xf32>
    tpu.vector_store %arg10[%c0_28, %c1_29, %c8, %c0_30], %20 {strides = array<i32>} : memref<2x18x32x128xf32, #tpu.memory_space<vmem>>, vector<2x16x16x128xf32>,
    %c0_31 = arith.constant 0 : index
    %c0_32 = arith.constant 0 : index
    %22 = vector.load %arg4[%c0_31, %c0_32] : memref<9x128xf32, #tpu.memory_space<vmem>>, vector<9x128xf32>
    %cst_33 = arith.constant 0.000000e+00 : f32
    %23 = vector.broadcast %cst_33 : f32 to vector<2x8x8x128xf32>
    %c0_34 = arith.constant 0 : index
    %c0_35 = arith.constant 0 : index
    %c7_36 = arith.constant 7 : index
    %c0_37 = arith.constant 0 : index
    %24 = tpu.strided_load %arg10[%c0_34, %c0_35, %c7_36, %c0_37] {strides = array<i32: 1, 2, 2, 1>} : memref<2x18x32x128xf32, #tpu.memory_space<vmem>>, vector<2x8x8x128xf32>
    %25 = vector.extract_strided_slice %22 {offsets = [0, 0], sizes = [1, 128], strides = [1, 1]} : vector<9x128xf32> to vector<1x128xf32>
    %26 = vector.shape_cast %25 : vector<1x128xf32> to vector<128xf32>
    %27 = vector.shape_cast %26 : vector<128xf32> to vector<1x1x1x128xf32>
    %28 = vector.broadcast %27 : vector<1x1x1x128xf32> to vector<2x8x8x128xf32>
    %29 = arith.mulf %24, %28 : vector<2x8x8x128xf32>
    %30 = arith.addf %23, %29 : vector<2x8x8x128xf32>
    %c0_38 = arith.constant 0 : index
    %c0_39 = arith.constant 0 : index
    %c8_40 = arith.constant 8 : index
    %c0_41 = arith.constant 0 : index
    %31 = tpu.strided_load %arg10[%c0_38, %c0_39, %c8_40, %c0_41] {strides = array<i32: 1, 2, 2, 1>} : memref<2x18x32x128xf32, #tpu.memory_space<vmem>>, vector<2x8x8x128xf32>
    %32 = vector.extract_strided_slice %22 {offsets = [1, 0], sizes = [1, 128], strides = [1, 1]} : vector<9x128xf32> to vector<1x128xf32>
    %33 = vector.shape_cast %32 : vector<1x128xf32> to vector<128xf32>
    %34 = vector.shape_cast %33 : vector<128xf32> to vector<1x1x1x128xf32>
    %35 = vector.broadcast %34 : vector<1x1x1x128xf32> to vector<2x8x8x128xf32>
    %36 = arith.mulf %31, %35 : vector<2x8x8x128xf32>
    %37 = arith.addf %30, %36 : vector<2x8x8x128xf32>
    %c0_42 = arith.constant 0 : index
    %c0_43 = arith.constant 0 : index
    %c9 = arith.constant 9 : index
    %c0_44 = arith.constant 0 : index
    %38 = tpu.strided_load %arg10[%c0_42, %c0_43, %c9, %c0_44] {strides = array<i32: 1, 2, 2, 1>} : memref<2x18x32x128xf32, #tpu.memory_space<vmem>>, vector<2x8x8x128xf32>
    %39 = vector.extract_strided_slice %22 {offsets = [2, 0], sizes = [1, 128], strides = [1, 1]} : vector<9x128xf32> to vector<1x128xf32>
    %40 = vector.shape_cast %39 : vector<1x128xf32> to vector<128xf32>
    %41 = vector.shape_cast %40 : vector<128xf32> to vector<1x1x1x128xf32>
    %42 = vector.broadcast %41 : vector<1x1x1x128xf32> to vector<2x8x8x128xf32>
    %43 = arith.mulf %38, %42 : vector<2x8x8x128xf32>
    %44 = arith.addf %37, %43 : vector<2x8x8x128xf32>
    %c0_45 = arith.constant 0 : index
    %c1_46 = arith.constant 1 : index
    %c7_47 = arith.constant 7 : index
    %c0_48 = arith.constant 0 : index
    %45 = tpu.strided_load %arg10[%c0_45, %c1_46, %c7_47, %c0_48] {strides = array<i32: 1, 2, 2, 1>} : memref<2x18x32x128xf32, #tpu.memory_space<vmem>>, vector<2x8x8x128xf32>
    %46 = vector.extract_strided_slice %22 {offsets = [3, 0], sizes = [1, 128], strides = [1, 1]} : vector<9x128xf32> to vector<1x128xf32>
    %47 = vector.shape_cast %46 : vector<1x128xf32> to vector<128xf32>
    %48 = vector.shape_cast %47 : vector<128xf32> to vector<1x1x1x128xf32>
    %49 = vector.broadcast %48 : vector<1x1x1x128xf32> to vector<2x8x8x128xf32>
    %50 = arith.mulf %45, %49 : vector<2x8x8x128xf32>
    %51 = arith.addf %44, %50 : vector<2x8x8x128xf32>
    %c0_49 = arith.constant 0 : index
    %c1_50 = arith.constant 1 : index
    %c8_51 = arith.constant 8 : index
    %c0_52 = arith.constant 0 : index
    %52 = tpu.strided_load %arg10[%c0_49, %c1_50, %c8_51, %c0_52] {strides = array<i32: 1, 2, 2, 1>} : memref<2x18x32x128xf32, #tpu.memory_space<vmem>>, vector<2x8x8x128xf32>
    %53 = vector.extract_strided_slice %22 {offsets = [4, 0], sizes = [1, 128], strides = [1, 1]} : vector<9x128xf32> to vector<1x128xf32>
    %54 = vector.shape_cast %53 : vector<1x128xf32> to vector<128xf32>
    %55 = vector.shape_cast %54 : vector<128xf32> to vector<1x1x1x128xf32>
    %56 = vector.broadcast %55 : vector<1x1x1x128xf32> to vector<2x8x8x128xf32>
    %57 = arith.mulf %52, %56 : vector<2x8x8x128xf32>
    %58 = arith.addf %51, %57 : vector<2x8x8x128xf32>
    %c0_53 = arith.constant 0 : index
    %c1_54 = arith.constant 1 : index
    %c9_55 = arith.constant 9 : index
    %c0_56 = arith.constant 0 : index
    %59 = tpu.strided_load %arg10[%c0_53, %c1_54, %c9_55, %c0_56] {strides = array<i32: 1, 2, 2, 1>} : memref<2x18x32x128xf32, #tpu.memory_space<vmem>>, vector<2x8x8x128xf32>
    %60 = vector.extract_strided_slice %22 {offsets = [5, 0], sizes = [1, 128], strides = [1, 1]} : vector<9x128xf32> to vector<1x128xf32>
    %61 = vector.shape_cast %60 : vector<1x128xf32> to vector<128xf32>
    %62 = vector.shape_cast %61 : vector<128xf32> to vector<1x1x1x128xf32>
    %63 = vector.broadcast %62 : vector<1x1x1x128xf32> to vector<2x8x8x128xf32>
    %64 = arith.mulf %59, %63 : vector<2x8x8x128xf32>
    %65 = arith.addf %58, %64 : vector<2x8x8x128xf32>
    %c0_57 = arith.constant 0 : index
    %c2 = arith.constant 2 : index
    %c7_58 = arith.constant 7 : index
    %c0_59 = arith.constant 0 : index
    %66 = tpu.strided_load %arg10[%c0_57, %c2, %c7_58, %c0_59] {strides = array<i32: 1, 2, 2, 1>} : memref<2x18x32x128xf32, #tpu.memory_space<vmem>>, vector<2x8x8x128xf32>
    %67 = vector.extract_strided_slice %22 {offsets = [6, 0], sizes = [1, 128], strides = [1, 1]} : vector<9x128xf32> to vector<1x128xf32>
    %68 = vector.shape_cast %67 : vector<1x128xf32> to vector<128xf32>
    %69 = vector.shape_cast %68 : vector<128xf32> to vector<1x1x1x128xf32>
    %70 = vector.broadcast %69 : vector<1x1x1x128xf32> to vector<2x8x8x128xf32>
    %71 = arith.mulf %66, %70 : vector<2x8x8x128xf32>
    %72 = arith.addf %65, %71 : vector<2x8x8x128xf32>
    %c0_60 = arith.constant 0 : index
    %c2_61 = arith.constant 2 : index
    %c8_62 = arith.constant 8 : index
    %c0_63 = arith.constant 0 : index
    %73 = tpu.strided_load %arg10[%c0_60, %c2_61, %c8_62, %c0_63] {strides = array<i32: 1, 2, 2, 1>} : memref<2x18x32x128xf32, #tpu.memory_space<vmem>>, vector<2x8x8x128xf32>
    %74 = vector.extract_strided_slice %22 {offsets = [7, 0], sizes = [1, 128], strides = [1, 1]} : vector<9x128xf32> to vector<1x128xf32>
    %75 = vector.shape_cast %74 : vector<1x128xf32> to vector<128xf32>
    %76 = vector.shape_cast %75 : vector<128xf32> to vector<1x1x1x128xf32>
    %77 = vector.broadcast %76 : vector<1x1x1x128xf32> to vector<2x8x8x128xf32>
    %78 = arith.mulf %73, %77 : vector<2x8x8x128xf32>
    %79 = arith.addf %72, %78 : vector<2x8x8x128xf32>
    %c0_64 = arith.constant 0 : index
    %c2_65 = arith.constant 2 : index
    %c9_66 = arith.constant 9 : index
    %c0_67 = arith.constant 0 : index
    %80 = tpu.strided_load %arg10[%c0_64, %c2_65, %c9_66, %c0_67] {strides = array<i32: 1, 2, 2, 1>} : memref<2x18x32x128xf32, #tpu.memory_space<vmem>>, vector<2x8x8x128xf32>
    %81 = vector.extract_strided_slice %22 {offsets = [8, 0], sizes = [1, 128], strides = [1, 1]} : vector<9x128xf32> to vector<1x128xf32>
    %82 = vector.shape_cast %81 : vector<1x128xf32> to vector<128xf32>
    %83 = vector.shape_cast %82 : vector<128xf32> to vector<1x1x1x128xf32>
    %84 = vector.broadcast %83 : vector<1x1x1x128xf32> to vector<2x8x8x128xf32>
    %85 = arith.mulf %80, %84 : vector<2x8x8x128xf32>
    %86 = arith.addf %79, %85 : vector<2x8x8x128xf32>
    %87 = vector.shape_cast %86 : vector<2x8x8x128xf32> to vector<128x128xf32>
    %c0_68 = arith.constant 0 : index
    %c0_69 = arith.constant 0 : index
    %88 = vector.load %arg5[%c0_68, %c0_69] : memref<1x128xf32, #tpu.memory_space<vmem>>, vector<1x128xf32>
    %89 = vector.broadcast %88 : vector<1x128xf32> to vector<128x128xf32>
    %90 = arith.addf %87, %89 : vector<128x128xf32>
    %cst_70 = arith.constant 0.000000e+00 : f32
    %91 = vector.broadcast %cst_70 : f32 to vector<128x128xf32>
    %92 = arith.maximumf %90, %91 : vector<128x128xf32>
    %93 = arith.truncf %92 : vector<128x128xf32> to vector<128x128xbf16>
    %c0_71 = arith.constant 0 : index
    %c0_72 = arith.constant 0 : index
    %94 = vector.load %arg6[%c0_71, %c0_72] : memref<128x128xbf16, #tpu.memory_space<vmem>>, vector<128x128xbf16>
    %cst_73 = arith.constant dense<0.000000e+00> : vector<128x128xf32>
    %95 = tpu.matmul %93, %94, %cst_73 {dimension_numbers = #tpu.dot_dimension_numbers<[1], [0], [0], [1], [0, 0, 1, 1], [], []>} : vector<128x128xbf16>, vector<128x128xbf16>, vector<128x128xf32> -> vector<128x128xf32>
    %c0_74 = arith.constant 0 : index
    %c0_75 = arith.constant 0 : index
    %96 = vector.load %arg7[%c0_74, %c0_75] : memref<1x128xf32, #tpu.memory_space<vmem>>, vector<1x128xf32>
    %97 = vector.broadcast %96 : vector<1x128xf32> to vector<128x128xf32>
    %98 = arith.addf %95, %97 : vector<128x128xf32>
    %99 = vector.extract_strided_slice %98 {offsets = [0, 0], sizes = [128, 12], strides = [1, 1]} : vector<128x128xf32> to vector<128x12xf32>
    %100 = vector.shape_cast %99 : vector<128x12xf32> to vector<2x64x12xf32>
    %c0_76 = arith.constant 0 : index
    %c0_77 = arith.constant 0 : index
    %c0_78 = arith.constant 0 : index
    %101 = vector.load %arg8[%c0_76, %c0_77, %c0_78] : memref<2x64x12xf32, #tpu.memory_space<vmem>>, vector<2x64x12xf32>
    tpu.vector_store %arg8[%c0_76, %c0_77, %c0_78], %100 {strides = array<i32>} : memref<2x64x12xf32, #tpu.memory_space<vmem>>, vector<2x64x12xf32>,
    return
  }
  func.func @transform_0(%arg0: i32) -> (i32, i32, i32) {
    %c0_i32 = arith.constant 0 : i32
    %c0_i32_0 = arith.constant 0 : i32
    %c0_i32_1 = arith.constant 0 : i32
    return %arg0, %c0_i32, %c0_i32_0 : i32, i32, i32
  }
  func.func @transform_1(%arg0: i32) -> (i32, i32) {
    %c0_i32 = arith.constant 0 : i32
    %c0_i32_0 = arith.constant 0 : i32
    %c0_i32_1 = arith.constant 0 : i32
    return %c0_i32, %c0_i32_0 : i32, i32
  }
  func.func @transform_2(%arg0: i32) -> (i32, i32) {
    %c0_i32 = arith.constant 0 : i32
    %c0_i32_0 = arith.constant 0 : i32
    %c0_i32_1 = arith.constant 0 : i32
    return %c0_i32, %c0_i32_0 : i32, i32
  }
  func.func @transform_3(%arg0: i32) -> (i32, i32) {
    %c0_i32 = arith.constant 0 : i32
    %c0_i32_0 = arith.constant 0 : i32
    %c0_i32_1 = arith.constant 0 : i32
    return %c0_i32, %c0_i32_0 : i32, i32
  }
  func.func @transform_4(%arg0: i32) -> (i32, i32) {
    %c0_i32 = arith.constant 0 : i32
    %c0_i32_0 = arith.constant 0 : i32
    %c0_i32_1 = arith.constant 0 : i32
    return %c0_i32, %c0_i32_0 : i32, i32
  }
  func.func @transform_5(%arg0: i32) -> (i32, i32) {
    %c0_i32 = arith.constant 0 : i32
    %c0_i32_0 = arith.constant 0 : i32
    %c0_i32_1 = arith.constant 0 : i32
    return %c0_i32, %c0_i32_0 : i32, i32
  }
  func.func @transform_6(%arg0: i32) -> (i32, i32) {
    %c0_i32 = arith.constant 0 : i32
    %c0_i32_0 = arith.constant 0 : i32
    %c0_i32_1 = arith.constant 0 : i32
    return %c0_i32, %c0_i32_0 : i32, i32
  }
  func.func @transform_7(%arg0: i32) -> (i32, i32, i32) {
    %c0_i32 = arith.constant 0 : i32
    %c0_i32_0 = arith.constant 0 : i32
    %c0_i32_1 = arith.constant 0 : i32
    return %arg0, %c0_i32, %c0_i32_0 : i32, i32, i32
  }
}

</mosaic_0001>

<llo_original>
// kernel: tpu_custom_call.1
$region0: #{tpu_custom_call.1}
  #allocation0 [shape = 'u32[]', space=smem, size = 0x4, offset = 0x4, fixed_abs, tag = 'smem constant byte address 0x4 - core index']
  #allocation1 [shape = 'u32[144,128]{1,0:T(1,128)}', space=vmem, size = 0x12000, scoped, tag = 'internal scratch']
  #allocation2 [shape = 'f32[512,128]{1,0:T(8,128)}', space=vmem, size = 0x40000, scoped, tag = 'scratch operand']
  #allocation3 [shape = 'f32[2,18,32,128]{3,2,1,0:T(8,128)}', space=vmem, size = 0x90000, scoped, tag = 'scratch operand']
  %s0 = inlined_call_operand.vmem [shape: f32[2,256,4], index: 0, kind: input, shape index: {}]
  %s1 = inlined_call_operand.vmem [shape: bf16[128,128], index: 1, kind: input, shape index: {}]
  %s2 = inlined_call_operand.vmem [shape: f32[1,128], index: 2, kind: input, shape index: {}]
  %s3 = inlined_call_operand.vmem [shape: f32[9,128], index: 3, kind: input, shape index: {}]
  %s4 = inlined_call_operand.vmem [shape: f32[1,128], index: 4, kind: input, shape index: {}]
  %s5 = inlined_call_operand.vmem [shape: bf16[128,128], index: 5, kind: input, shape index: {}]
  %s6 = inlined_call_operand.vmem [shape: f32[1,128], index: 6, kind: input, shape index: {}]
  %s7 = inlined_call_operand.vmem [shape: f32[2,64,12], index: 7, kind: output, shape index: {}]
  %s8 = sld [smem:[#allocation0]]
  $region38: #{tpu_custom_call.1} parent=0
    _
  %s10 = ssub.s32 1, %s8
  %s11 = scalar_select 0, %s10, %s8
  // Predicated region
  $region2: #{tpu_custom_call.1} parent=0 // pred_check
    _
  $region3: #{tpu_custom_call.1} parent=0 // pred_check_branch
    %13 = sbr.rel (0) target = $region5
  $region4: #{tpu_custom_call.1} parent=0 // pred_region
    _
  $region5: #{tpu_custom_call.1} parent=0 // pred_fallthru
    _
  // Predicated region
  $region6: #{tpu_custom_call.1} parent=0 // pred_check
    _
  $region7: #{tpu_custom_call.1} parent=0 // pred_check_branch
    %15 = sbr.rel (0) target = $region9
  $region8: #{tpu_custom_call.1} parent=0 // pred_region
    _
  $region9: #{tpu_custom_call.1} parent=0 // pred_fallthru
    _
  // Predicated region
  $region10: #{tpu_custom_call.1} parent=0 // pred_check
    _
  $region11: #{tpu_custom_call.1} parent=0 // pred_check_branch
    %17 = sbr.rel (0) target = $region13
  $region12: #{tpu_custom_call.1} parent=0 // pred_region
    _
  $region13: #{tpu_custom_call.1} parent=0 // pred_fallthru
    _
  // Predicated region
  $region14: #{tpu_custom_call.1} parent=0 // pred_check
    _
  $region15: #{tpu_custom_call.1} parent=0 // pred_check_branch
    %19 = sbr.rel (0) target = $region17
  $region16: #{tpu_custom_call.1} parent=0 // pred_region
    _
  $region17: #{tpu_custom_call.1} parent=0 // pred_fallthru
    _
  // Predicated region
  $region18: #{tpu_custom_call.1} parent=0 // pred_check
    _
  $region19: #{tpu_custom_call.1} parent=0 // pred_check_branch
    %21 = sbr.rel (0) target = $region21
  $region20: #{tpu_custom_call.1} parent=0 // pred_region
    _
  $region21: #{tpu_custom_call.1} parent=0 // pred_fallthru
    _
  // Predicated region
  $region22: #{tpu_custom_call.1} parent=0 // pred_check
    _
  $region23: #{tpu_custom_call.1} parent=0 // pred_check_branch
    %23 = sbr.rel (0) target = $region25
  $region24: #{tpu_custom_call.1} parent=0 // pred_region
    _
  $region25: #{tpu_custom_call.1} parent=0 // pred_fallthru
    _
  // Predicated region
  $region26: #{tpu_custom_call.1} parent=0 // pred_check
    _
  $region27: #{tpu_custom_call.1} parent=0 // pred_check_branch
    %25 = sbr.rel (0) target = $region29
  $region28: #{tpu_custom_call.1} parent=0 // pred_region
    _
  $region29: #{tpu_custom_call.1} parent=0 // pred_fallthru
    _
  %v27 = vld [vmem:[%s0] sm:$0xff]
  %v28 = vld [vmem:[%s0 + $0x8] sm:$0xff]
  %v29 = vld [vmem:[%s0 + $0x10] sm:$0xff]
  %v30 = vld [vmem:[%s0 + $0x18] sm:$0xff]
  %v31 = vld [vmem:[%s0 + $0x20] sm:$0xff]
  %v32 = vld [vmem:[%s0 + $0x28] sm:$0xff]
  %v33 = vld [vmem:[%s0 + $0x30] sm:$0xff]
  %v34 = vld [vmem:[%s0 + $0x38] sm:$0xff]
  %v35 = vld [vmem:[%s0 + $0x40] sm:$0xff]
  %v36 = vld [vmem:[%s0 + $0x48] sm:$0xff]
  %v37 = vld [vmem:[%s0 + $0x50] sm:$0xff]
  %v38 = vld [vmem:[%s0 + $0x58] sm:$0xff]
  %v39 = vld [vmem:[%s0 + $0x60] sm:$0xff]
  %v40 = vld [vmem:[%s0 + $0x68] sm:$0xff]
  %v41 = vld [vmem:[%s0 + $0x70] sm:$0xff]
  %v42 = vld [vmem:[%s0 + $0x78] sm:$0xff]
  %v43 = vld [vmem:[%s0 + $0x80] sm:$0xff]
  %v44 = vld [vmem:[%s0 + $0x88] sm:$0xff]
  %v45 = vld [vmem:[%s0 + $0x90] sm:$0xff]
  %v46 = vld [vmem:[%s0 + $0x98] sm:$0xff]
  %v47 = vld [vmem:[%s0 + $0xa0] sm:$0xff]
  %v48 = vld [vmem:[%s0 + $0xa8] sm:$0xff]
  %v49 = vld [vmem:[%s0 + $0xb0] sm:$0xff]
  %v50 = vld [vmem:[%s0 + $0xb8] sm:$0xff]
  %v51 = vld [vmem:[%s0 + $0xc0] sm:$0xff]
  %v52 = vld [vmem:[%s0 + $0xc8] sm:$0xff]
  %v53 = vld [vmem:[%s0 + $0xd0] sm:$0xff]
  %v54 = vld [vmem:[%s0 + $0xd8] sm:$0xff]
  %v55 = vld [vmem:[%s0 + $0xe0] sm:$0xff]
  %v56 = vld [vmem:[%s0 + $0xe8] sm:$0xff]
  %v57 = vld [vmem:[%s0 + $0xf0] sm:$0xff]
  %v58 = vld [vmem:[%s0 + $0xf8] sm:$0xff]
  %v59 = vld [vmem:[%s0 + $0x100] sm:$0xff]
  %v60 = vld [vmem:[%s0 + $0x108] sm:$0xff]
  %v61 = vld [vmem:[%s0 + $0x110] sm:$0xff]
  %v62 = vld [vmem:[%s0 + $0x118] sm:$0xff]
  %v63 = vld [vmem:[%s0 + $0x120] sm:$0xff]
  %v64 = vld [vmem:[%s0 + $0x128] sm:$0xff]
  %v65 = vld [vmem:[%s0 + $0x130] sm:$0xff]
  %v66 = vld [vmem:[%s0 + $0x138] sm:$0xff]
  %v67 = vld [vmem:[%s0 + $0x140] sm:$0xff]
  %v68 = vld [vmem:[%s0 + $0x148] sm:$0xff]
  %v69 = vld [vmem:[%s0 + $0x150] sm:$0xff]
  %v70 = vld [vmem:[%s0 + $0x158] sm:$0xff]
  %v71 = vld [vmem:[%s0 + $0x160] sm:$0xff]
  %v72 = vld [vmem:[%s0 + $0x168] sm:$0xff]
  %v73 = vld [vmem:[%s0 + $0x170] sm:$0xff]
  %v74 = vld [vmem:[%s0 + $0x178] sm:$0xff]
  %v75 = vld [vmem:[%s0 + $0x180] sm:$0xff]
  %v76 = vld [vmem:[%s0 + $0x188] sm:$0xff]
  %v77 = vld [vmem:[%s0 + $0x190] sm:$0xff]
  %v78 = vld [vmem:[%s0 + $0x198] sm:$0xff]
  %v79 = vld [vmem:[%s0 + $0x1a0] sm:$0xff]
  %v80 = vld [vmem:[%s0 + $0x1a8] sm:$0xff]
  %v81 = vld [vmem:[%s0 + $0x1b0] sm:$0xff]
  %v82 = vld [vmem:[%s0 + $0x1b8] sm:$0xff]
  %v83 = vld [vmem:[%s0 + $0x1c0] sm:$0xff]
  %v84 = vld [vmem:[%s0 + $0x1c8] sm:$0xff]
  %v85 = vld [vmem:[%s0 + $0x1d0] sm:$0xff]
  %v86 = vld [vmem:[%s0 + $0x1d8] sm:$0xff]
  %v87 = vld [vmem:[%s0 + $0x1e0] sm:$0xff]
  %v88 = vld [vmem:[%s0 + $0x1e8] sm:$0xff]
  %v89 = vld [vmem:[%s0 + $0x1f0] sm:$0xff]
  %v90 = vld [vmem:[%s0 + $0x1f8] sm:$0xff]
  %91 = vst [vmem:[#allocation2] sm:$0xff] 0.0
  %92 = vst [vmem:[#allocation2 + $0x8] sm:$0xff] 0.0
  %93 = vst [vmem:[#allocation2 + $0x10] sm:$0xff] 0.0
  %94 = vst [vmem:[#allocation2 + $0x18] sm:$0xff] 0.0
  %95 = vst [vmem:[#allocation2 + $0x20] sm:$0xff] 0.0
  %96 = vst [vmem:[#allocation2 + $0x28] sm:$0xff] 0.0
  %97 = vst [vmem:[#allocation2 + $0x30] sm:$0xff] 0.0
  %98 = vst [vmem:[#allocation2 + $0x38] sm:$0xff] 0.0
  %99 = vst [vmem:[#allocation2 + $0x40] sm:$0xff] 0.0
  %100 = vst [vmem:[#allocation2 + $0x48] sm:$0xff] 0.0
  %101 = vst [vmem:[#allocation2 + $0x50] sm:$0xff] 0.0
  %102 = vst [vmem:[#allocation2 + $0x58] sm:$0xff] 0.0
  %103 = vst [vmem:[#allocation2 + $0x60] sm:$0xff] 0.0
  %104 = vst [vmem:[#allocation2 + $0x68] sm:$0xff] 0.0
  %105 = vst [vmem:[#allocation2 + $0x70] sm:$0xff] 0.0
  %106 = vst [vmem:[#allocation2 + $0x78] sm:$0xff] 0.0
  %107 = vst [vmem:[#allocation2 + $0x80] sm:$0xff] 0.0
  %108 = vst [vmem:[#allocation2 + $0x88] sm:$0xff] 0.0
  %109 = vst [vmem:[#allocation2 + $0x90] sm:$0xff] 0.0
  %110 = vst [vmem:[#allocation2 + $0x98] sm:$0xff] 0.0
  %111 = vst [vmem:[#allocation2 + $0xa0] sm:$0xff] 0.0
  %112 = vst [vmem:[#allocation2 + $0xa8] sm:$0xff] 0.0
  %113 = vst [vmem:[#allocation2 + $0xb0] sm:$0xff] 0.0
  %114 = vst [vmem:[#allocation2 + $0xb8] sm:$0xff] 0.0
  %115 = vst [vmem:[#allocation2 + $0xc0] sm:$0xff] 0.0
  %116 = vst [vmem:[#allocation2 + $0xc8] sm:$0xff] 0.0
  %117 = vst [vmem:[#allocation2 + $0xd0] sm:$0xff] 0.0
  %118 = vst [vmem:[#allocation2 + $0xd8] sm:$0xff] 0.0
  %119 = vst [vmem:[#allocation2 + $0xe0] sm:$0xff] 0.0
  %120 = vst [vmem:[#allocation2 + $0xe8] sm:$0xff] 0.0
  %121 = vst [vmem:[#allocation2 + $0xf0] sm:$0xff] 0.0
  %122 = vst [vmem:[#allocation2 + $0xf8] sm:$0xff] 0.0
  %123 = vst [vmem:[#allocation2 + $0x100] sm:$0xff] 0.0
  %124 = vst [vmem:[#allocation2 + $0x108] sm:$0xff] 0.0
  %125 = vst [vmem:[#allocation2 + $0x110] sm:$0xff] 0.0
  %126 = vst [vmem:[#allocation2 + $0x118] sm:$0xff] 0.0
  %127 = vst [vmem:[#allocation2 + $0x120] sm:$0xff] 0.0
  %128 = vst [vmem:[#allocation2 + $0x128] sm:$0xff] 0.0
  %129 = vst [vmem:[#allocation2 + $0x130] sm:$0xff] 0.0
  %130 = vst [vmem:[#allocation2 + $0x138] sm:$0xff] 0.0
  %131 = vst [vmem:[#allocation2 + $0x140] sm:$0xff] 0.0
  %132 = vst [vmem:[#allocation2 + $0x148] sm:$0xff] 0.0
  %133 = vst [vmem:[#allocation2 + $0x150] sm:$0xff] 0.0
  %134 = vst [vmem:[#allocation2 + $0x158] sm:$0xff] 0.0
  %135 = vst [vmem:[#allocation2 + $0x160] sm:$0xff] 0.0
  %136 = vst [vmem:[#allocation2 + $0x168] sm:$0xff] 0.0
  %137 = vst [vmem:[#allocation2 + $0x170] sm:$0xff] 0.0
  %138 = vst [vmem:[#allocation2 + $0x178] sm:$0xff] 0.0
  %139 = vst [vmem:[#allocation2 + $0x180] sm:$0xff] 0.0
  %140 = vst [vmem:[#allocation2 + $0x188] sm:$0xff] 0.0
  %141 = vst [vmem:[#allocation2 + $0x190] sm:$0xff] 0.0
  %142 = vst [vmem:[#allocation2 + $0x198] sm:$0xff] 0.0
  %143 = vst [vmem:[#allocation2 + $0x1a0] sm:$0xff] 0.0
  %144 = vst [vmem:[#allocation2 + $0x1a8] sm:$0xff] 0.0
  %145 = vst [vmem:[#allocation2 + $0x1b0] sm:$0xff] 0.0
  %146 = vst [vmem:[#allocation2 + $0x1b8] sm:$0xff] 0.0
  %147 = vst [vmem:[#allocation2 + $0x1c0] sm:$0xff] 0.0
  %148 = vst [vmem:[#allocation2 + $0x1c8] sm:$0xff] 0.0
  %149 = vst [vmem:[#allocation2 + $0x1d0] sm:$0xff] 0.0
  %150 = vst [vmem:[#allocation2 + $0x1d8] sm:$0xff] 0.0
  %151 = vst [vmem:[#allocation2 + $0x1e0] sm:$0xff] 0.0
  %152 = vst [vmem:[#allocation2 + $0x1e8] sm:$0xff] 0.0
  %153 = vst [vmem:[#allocation2 + $0x1f0] sm:$0xff] 0.0
  %154 = vst [vmem:[#allocation2 + $0x1f8] sm:$0xff] 0.0
  %vm155 = vcmask 31744
  %156 = vst.msk [vmem:[#allocation2] sm:$0xff] %vm155, %v27
  %157 = vst.msk [vmem:[#allocation2 + $0x8] sm:$0xff] %vm155, %v28
  %158 = vst.msk [vmem:[#allocation2 + $0x10] sm:$0xff] %vm155, %v29
  %159 = vst.msk [vmem:[#allocation2 + $0x18] sm:$0xff] %vm155, %v30
  %160 = vst.msk [vmem:[#allocation2 + $0x20] sm:$0xff] %vm155, %v31
  %161 = vst.msk [vmem:[#allocation2 + $0x28] sm:$0xff] %vm155, %v32
  %162 = vst.msk [vmem:[#allocation2 + $0x30] sm:$0xff] %vm155, %v33
  %163 = vst.msk [vmem:[#allocation2 + $0x38] sm:$0xff] %vm155, %v34
  %164 = vst.msk [vmem:[#allocation2 + $0x40] sm:$0xff] %vm155, %v35
  %165 = vst.msk [vmem:[#allocation2 + $0x48] sm:$0xff] %vm155, %v36
  %166 = vst.msk [vmem:[#allocation2 + $0x50] sm:$0xff] %vm155, %v37
  %167 = vst.msk [vmem:[#allocation2 + $0x58] sm:$0xff] %vm155, %v38
  %168 = vst.msk [vmem:[#allocation2 + $0x60] sm:$0xff] %vm155, %v39
  %169 = vst.msk [vmem:[#allocation2 + $0x68] sm:$0xff] %vm155, %v40
  %170 = vst.msk [vmem:[#allocation2 + $0x70] sm:$0xff] %vm155, %v41
  %171 = vst.msk [vmem:[#allocation2 + $0x78] sm:$0xff] %vm155, %v42
  %172 = vst.msk [vmem:[#allocation2 + $0x80] sm:$0xff] %vm155, %v43
  %173 = vst.msk [vmem:[#allocation2 + $0x88] sm:$0xff] %vm155, %v44
  %174 = vst.msk [vmem:[#allocation2 + $0x90] sm:$0xff] %vm155, %v45
  %175 = vst.msk [vmem:[#allocation2 + $0x98] sm:$0xff] %vm155, %v46
  %176 = vst.msk [vmem:[#allocation2 + $0xa0] sm:$0xff] %vm155, %v47
  %177 = vst.msk [vmem:[#allocation2 + $0xa8] sm:$0xff] %vm155, %v48
  %178 = vst.msk [vmem:[#allocation2 + $0xb0] sm:$0xff] %vm155, %v49
  %179 = vst.msk [vmem:[#allocation2 + $0xb8] sm:$0xff] %vm155, %v50
  %180 = vst.msk [vmem:[#allocation2 + $0xc0] sm:$0xff] %vm155, %v51
  %181 = vst.msk [vmem:[#allocation2 + $0xc8] sm:$0xff] %vm155, %v52
  %182 = vst.msk [vmem:[#allocation2 + $0xd0] sm:$0xff] %vm155, %v53
  %183 = vst.msk [vmem:[#allocation2 + $0xd8] sm:$0xff] %vm155, %v54
  %184 = vst.msk [vmem:[#allocation2 + $0xe0] sm:$0xff] %vm155, %v55
  %185 = vst.msk [vmem:[#allocation2 + $0xe8] sm:$0xff] %vm155, %v56
  %186 = vst.msk [vmem:[#allocation2 + $0xf0] sm:$0xff] %vm155, %v57
  %187 = vst.msk [vmem:[#allocation2 + $0xf8] sm:$0xff] %vm155, %v58
  %188 = vst.msk [vmem:[#allocation2 + $0x100] sm:$0xff] %vm155, %v59
  %189 = vst.msk [vmem:[#allocation2 + $0x108] sm:$0xff] %vm155, %v60
  %190 = vst.msk [vmem:[#allocation2 + $0x110] sm:$0xff] %vm155, %v61
  %191 = vst.msk [vmem:[#allocation2 + $0x118] sm:$0xff] %vm155, %v62
  %192 = vst.msk [vmem:[#allocation2 + $0x120] sm:$0xff] %vm155, %v63
  %193 = vst.msk [vmem:[#allocation2 + $0x128] sm:$0xff] %vm155, %v64
  %194 = vst.msk [vmem:[#allocation2 + $0x130] sm:$0xff] %vm155, %v65
  %195 = vst.msk [vmem:[#allocation2 + $0x138] sm:$0xff] %vm155, %v66
  %196 = vst.msk [vmem:[#allocation2 + $0x140] sm:$0xff] %vm155, %v67
  %197 = vst.msk [vmem:[#allocation2 + $0x148] sm:$0xff] %vm155, %v68
  %198 = vst.msk [vmem:[#allocation2 + $0x150] sm:$0xff] %vm155, %v69
  %199 = vst.msk [vmem:[#allocation2 + $0x158] sm:$0xff] %vm155, %v70
  %200 = vst.msk [vmem:[#allocation2 + $0x160] sm:$0xff] %vm155, %v71
  %201 = vst.msk [vmem:[#allocation2 + $0x168] sm:$0xff] %vm155, %v72
  %202 = vst.msk [vmem:[#allocation2 + $0x170] sm:$0xff] %vm155, %v73
  %203 = vst.msk [vmem:[#allocation2 + $0x178] sm:$0xff] %vm155, %v74
  %204 = vst.msk [vmem:[#allocation2 + $0x180] sm:$0xff] %vm155, %v75
  %205 = vst.msk [vmem:[#allocation2 + $0x188] sm:$0xff] %vm155, %v76
  %206 = vst.msk [vmem:[#allocation2 + $0x190] sm:$0xff] %vm155, %v77
  %207 = vst.msk [vmem:[#allocation2 + $0x198] sm:$0xff] %vm155, %v78
  %208 = vst.msk [vmem:[#allocation2 + $0x1a0] sm:$0xff] %vm155, %v79
  %209 = vst.msk [vmem:[#allocation2 + $0x1a8] sm:$0xff] %vm155, %v80
  %210 = vst.msk [vmem:[#allocation2 + $0x1b0] sm:$0xff] %vm155, %v81
  %211 = vst.msk [vmem:[#allocation2 + $0x1b8] sm:$0xff] %vm155, %v82
  %212 = vst.msk [vmem:[#allocation2 + $0x1c0] sm:$0xff] %vm155, %v83
  %213 = vst.msk [vmem:[#allocation2 + $0x1c8] sm:$0xff] %vm155, %v84
  %214 = vst.msk [vmem:[#allocation2 + $0x1d0] sm:$0xff] %vm155, %v85
  %215 = vst.msk [vmem:[#allocation2 + $0x1d8] sm:$0xff] %vm155, %v86
  %216 = vst.msk [vmem:[#allocation2 + $0x1e0] sm:$0xff] %vm155, %v87
  %217 = vst.msk [vmem:[#allocation2 + $0x1e8] sm:$0xff] %vm155, %v88
  %218 = vst.msk [vmem:[#allocation2 + $0x1f0] sm:$0xff] %vm155, %v89
  %219 = vst.msk [vmem:[#allocation2 + $0x1f8] sm:$0xff] %vm155, %v90
  %v220 = vld [vmem:[#allocation2] sm:$0xff]
  %v221 = vld [vmem:[#allocation2 + $0x8] sm:$0xff]
  %v222 = vld [vmem:[#allocation2 + $0x10] sm:$0xff]
  %v223 = vld [vmem:[#allocation2 + $0x18] sm:$0xff]
  %v224 = vld [vmem:[#allocation2 + $0x20] sm:$0xff]
  %v225 = vld [vmem:[#allocation2 + $0x28] sm:$0xff]
  %v226 = vld [vmem:[#allocation2 + $0x30] sm:$0xff]
  %v227 = vld [vmem:[#allocation2 + $0x38] sm:$0xff]
  %v228 = vld [vmem:[#allocation2 + $0x40] sm:$0xff]
  %v229 = vld [vmem:[#allocation2 + $0x48] sm:$0xff]
  %v230 = vld [vmem:[#allocation2 + $0x50] sm:$0xff]
  %v231 = vld [vmem:[#allocation2 + $0x58] sm:$0xff]
  %v232 = vld [vmem:[#allocation2 + $0x60] sm:$0xff]
  %v233 = vld [vmem:[#allocation2 + $0x68] sm:$0xff]
  %v234 = vld [vmem:[#allocation2 + $0x70] sm:$0xff]
  %v235 = vld [vmem:[#allocation2 + $0x78] sm:$0xff]
  %v236 = vld [vmem:[#allocation2 + $0x80] sm:$0xff]
  %v237 = vld [vmem:[#allocation2 + $0x88] sm:$0xff]
  %v238 = vld [vmem:[#allocation2 + $0x90] sm:$0xff]
  %v239 = vld [vmem:[#allocation2 + $0x98] sm:$0xff]
  %v240 = vld [vmem:[#allocation2 + $0xa0] sm:$0xff]
  %v241 = vld [vmem:[#allocation2 + $0xa8] sm:$0xff]
  %v242 = vld [vmem:[#allocation2 + $0xb0] sm:$0xff]
  %v243 = vld [vmem:[#allocation2 + $0xb8] sm:$0xff]
  %v244 = vld [vmem:[#allocation2 + $0xc0] sm:$0xff]
  %v245 = vld [vmem:[#allocation2 + $0xc8] sm:$0xff]
  %v246 = vld [vmem:[#allocation2 + $0xd0] sm:$0xff]
  %v247 = vld [vmem:[#allocation2 + $0xd8] sm:$0xff]
  %v248 = vld [vmem:[#allocation2 + $0xe0] sm:$0xff]
  %v249 = vld [vmem:[#allocation2 + $0xe8] sm:$0xff]
  %v250 = vld [vmem:[#allocation2 + $0xf0] sm:$0xff]
  %v251 = vld [vmem:[#allocation2 + $0xf8] sm:$0xff]
  %v252 = vld [vmem:[#allocation2 + $0x100] sm:$0xff]
  %v253 = vld [vmem:[#allocation2 + $0x108] sm:$0xff]
  %v254 = vld [vmem:[#allocation2 + $0x110] sm:$0xff]
  %v255 = vld [vmem:[#allocation2 + $0x118] sm:$0xff]
  %v256 = vld [vmem:[#allocation2 + $0x120] sm:$0xff]
  %v257 = vld [vmem:[#allocation2 + $0x128] sm:$0xff]
  %v258 = vld [vmem:[#allocation2 + $0x130] sm:$0xff]
  %v259 = vld [vmem:[#allocation2 + $0x138] sm:$0xff]
  %v260 = vld [vmem:[#allocation2 + $0x140] sm:$0xff]
  %v261 = vld [vmem:[#allocation2 + $0x148] sm:$0xff]
  %v262 = vld [vmem:[#allocation2 + $0x150] sm:$0xff]
  %v263 = vld [vmem:[#allocation2 + $0x158] sm:$0xff]
  %v264 = vld [vmem:[#allocation2 + $0x160] sm:$0xff]
  %v265 = vld [vmem:[#allocation2 + $0x168] sm:$0xff]
  %v266 = vld [vmem:[#allocation2 + $0x170] sm:$0xff]
  %v267 = vld [vmem:[#allocation2 + $0x178] sm:$0xff]
  %v268 = vld [vmem:[#allocation2 + $0x180] sm:$0xff]
  %v269 = vld [vmem:[#allocation2 + $0x188] sm:$0xff]
  %v270 = vld [vmem:[#allocation2 + $0x190] sm:$0xff]
  %v271 = vld [vmem:[#allocation2 + $0x198] sm:$0xff]
  %v272 = vld [vmem:[#allocation2 + $0x1a0] sm:$0xff]
  %v273 = vld [vmem:[#allocation2 + $0x1a8] sm:$0xff]
  %v274 = vld [vmem:[#allocation2 + $0x1b0] sm:$0xff]
  %v275 = vld [vmem:[#allocation2 + $0x1b8] sm:$0xff]
  %v276 = vld [vmem:[#allocation2 + $0x1c0] sm:$0xff]
  %v277 = vld [vmem:[#allocation2 + $0x1c8] sm:$0xff]
  %v278 = vld [vmem:[#allocation2 + $0x1d0] sm:$0xff]
  %v279 = vld [vmem:[#allocation2 + $0x1d8] sm:$0xff]
  %v280 = vld [vmem:[#allocation2 + $0x1e0] sm:$0xff]
  %v281 = vld [vmem:[#allocation2 + $0x1e8] sm:$0xff]
  %v282 = vld [vmem:[#allocation2 + $0x1f0] sm:$0xff]
  %v283 = vld [vmem:[#allocation2 + $0x1f8] sm:$0xff]
  %v284 = vpack.c.bf16 %v221, %v220
  %v285 = vpack.c.bf16 %v223, %v222
  %v286 = vpack.c.bf16 %v225, %v224
  %v287 = vpack.c.bf16 %v227, %v226
  %v288 = vpack.c.bf16 %v229, %v228
  %v289 = vpack.c.bf16 %v231, %v230
  %v290 = vpack.c.bf16 %v233, %v232
  %v291 = vpack.c.bf16 %v235, %v234
  %v292 = vpack.c.bf16 %v237, %v236
  %v293 = vpack.c.bf16 %v239, %v238
  %v294 = vpack.c.bf16 %v241, %v240
  %v295 = vpack.c.bf16 %v243, %v242
  %v296 = vpack.c.bf16 %v245, %v244
  %v297 = vpack.c.bf16 %v247, %v246
  %v298 = vpack.c.bf16 %v249, %v248
  %v299 = vpack.c.bf16 %v251, %v250
  %v300 = vpack.c.bf16 %v253, %v252
  %v301 = vpack.c.bf16 %v255, %v254
  %v302 = vpack.c.bf16 %v257, %v256
  %v303 = vpack.c.bf16 %v259, %v258
  %v304 = vpack.c.bf16 %v261, %v260
  %v305 = vpack.c.bf16 %v263, %v262
  %v306 = vpack.c.bf16 %v265, %v264
  %v307 = vpack.c.bf16 %v267, %v266
  %v308 = vpack.c.bf16 %v269, %v268
  %v309 = vpack.c.bf16 %v271, %v270
  %v310 = vpack.c.bf16 %v273, %v272
  %v311 = vpack.c.bf16 %v275, %v274
  %v312 = vpack.c.bf16 %v277, %v276
  %v313 = vpack.c.bf16 %v279, %v278
  %v314 = vpack.c.bf16 %v281, %v280
  %v315 = vpack.c.bf16 %v283, %v282
  %v316 = vld [vmem:[%s1] sm:$0xf]
  %v317 = vld [vmem:[%s1 + $0x4] sm:$0xf]
  %v318 = vld [vmem:[%s1 + $0x8] sm:$0xf]
  %v319 = vld [vmem:[%s1 + $0xc] sm:$0xf]
  %v320 = vld [vmem:[%s1 + $0x10] sm:$0xf]
  %v321 = vld [vmem:[%s1 + $0x14] sm:$0xf]
  %v322 = vld [vmem:[%s1 + $0x18] sm:$0xf]
  %v323 = vld [vmem:[%s1 + $0x1c] sm:$0xf]
  %v324 = vld [vmem:[%s1 + $0x20] sm:$0xf]
  %v325 = vld [vmem:[%s1 + $0x24] sm:$0xf]
  %v326 = vld [vmem:[%s1 + $0x28] sm:$0xf]
  %v327 = vld [vmem:[%s1 + $0x2c] sm:$0xf]
  %v328 = vld [vmem:[%s1 + $0x30] sm:$0xf]
  %v329 = vld [vmem:[%s1 + $0x34] sm:$0xf]
  %v330 = vld [vmem:[%s1 + $0x38] sm:$0xf]
  %v331 = vld [vmem:[%s1 + $0x3c] sm:$0xf]
  %v332 = vld [vmem:[%s2] sm:$0x1]
  %v334 = vlaneseq
  %v335 = vshrl.u32 %v334, 7
  %v336 = vsub.s32 0, %v335
  %v337 = vrot.slane %v332, %v336
  %v355 = vunpack.c.l.b16 %v316
  %v356 = vunpack.c.l.b16 %v317
  %v357 = vunpack.c.l.b16 %v318
  %v358 = vunpack.c.l.b16 %v319
  %v359 = vunpack.c.l.b16 %v320
  %v360 = vunpack.c.l.b16 %v321
  %v361 = vunpack.c.l.b16 %v322
  %v362 = vunpack.c.l.b16 %v323
  %v363 = vunpack.c.l.b16 %v324
  %v364 = vunpack.c.l.b16 %v325
  %v365 = vunpack.c.l.b16 %v326
  %v366 = vunpack.c.l.b16 %v327
  %v367 = vunpack.c.l.b16 %v328
  %v368 = vunpack.c.l.b16 %v329
  %v369 = vunpack.c.l.b16 %v330
  %v370 = vunpack.c.l.b16 %v331
  %v371 = vpack.c.b16 %v356, %v355
  %v372 = vpack.c.b16 %v358, %v357
  %v373 = vpack.c.b16 %v360, %v359
  %v374 = vpack.c.b16 %v362, %v361
  %v375 = vpack.c.b16 %v364, %v363
  %v376 = vpack.c.b16 %v366, %v365
  %v377 = vpack.c.b16 %v368, %v367
  %v378 = vpack.c.b16 %v370, %v369
  %387 = vmatprep.subr.bf16.mxu0 0
  %388 = vmatpush1.bf16.msra.mxu0 %v371
  %389 = vmatprep.subr.bf16.mxu0 0
  %390 = vmatpush1.bf16.msra.mxu0 %v372
  %391 = vmatprep.subr.bf16.mxu0 0
  %392 = vmatpush1.bf16.msra.mxu0 %v373
  %393 = vmatprep.subr.bf16.mxu0 0
  %394 = vmatpush1.bf16.msra.mxu0 %v374
  %395 = vmatprep.subr.bf16.mxu0 0
  %396 = vmatpush1.bf16.msra.mxu0 %v375
  %397 = vmatprep.subr.bf16.mxu0 0
  %398 = vmatpush1.bf16.msra.mxu0 %v376
  %399 = vmatprep.subr.bf16.mxu0 0
  %400 = vmatpush1.bf16.msra.mxu0 %v377
  %401 = vmatprep.subr.bf16.mxu0 0
  %402 = vmatpush1.bf16.msra.mxu0 %v378
  %403 = vmatprep.subr.bf16.mxu0 0
  %404 = vmatpush1.bf16.msra.mxu0 0
  %405 = vmatprep.subr.bf16.mxu0 0
  %406 = vmatpush1.bf16.msra.mxu0 0
  %407 = vmatprep.subr.bf16.mxu0 0
  %408 = vmatpush1.bf16.msra.mxu0 0
  %409 = vmatprep.subr.bf16.mxu0 0
  %410 = vmatpush1.bf16.msra.mxu0 0
  %411 = vmatprep.subr.bf16.mxu0 0
  %412 = vmatpush1.bf16.msra.mxu0 0
  %413 = vmatprep.subr.bf16.mxu0 0
  %414 = vmatpush1.bf16.msra.mxu0 0
  %415 = vmatprep.subr.bf16.mxu0 0
  %416 = vmatpush1.bf16.msra.mxu0 0
  %417 = vmatprep.subr.bf16.mxu0 0
  %418 = vmatpush1.bf16.msra.mxu0 0
  %419 = vmatprep.mubr.bf16.mxu0 0
  %420 = vmatmul.mubr.bf16.gmra.mrb[0].mxu0 %v284
  %v421 = vpop.f32.mrb[0].mxu0
  %v422 = vadd.f32 %v337, %v421
  %v423 = vpop.f32.mrb[0].mxu0
  %v424 = vpop.f32.mrb[0].mxu0
  %v425 = vadd.f32 %v337, %v424
  %v426 = vpop.f32.mrb[0].mxu0
  %427 = vmatprep.mubr.bf16.mxu0 0
  %428 = vmatmul.mubr.bf16.gmra.mrb[0].mxu0 %v285
  %v429 = vpop.f32.mrb[0].mxu0
  %v430 = vadd.f32 %v337, %v429
  %v431 = vpop.f32.mrb[0].mxu0
  %v432 = vpop.f32.mrb[0].mxu0
  %v433 = vadd.f32 %v337, %v432
  %v434 = vpop.f32.mrb[0].mxu0
  %435 = vmatprep.mubr.bf16.mxu0 0
  %436 = vmatmul.mubr.bf16.gmra.mrb[0].mxu0 %v286
  %v437 = vpop.f32.mrb[0].mxu0
  %v438 = vadd.f32 %v337, %v437
  %v439 = vpop.f32.mrb[0].mxu0
  %v440 = vpop.f32.mrb[0].mxu0
  %v441 = vadd.f32 %v337, %v440
  %v442 = vpop.f32.mrb[0].mxu0
  %443 = vmatprep.mubr.bf16.mxu0 0
  %444 = vmatmul.mubr.bf16.gmra.mrb[0].mxu0 %v287
  %v445 = vpop.f32.mrb[0].mxu0
  %v446 = vadd.f32 %v337, %v445
  %v447 = vpop.f32.mrb[0].mxu0
  %v448 = vpop.f32.mrb[0].mxu0
  %v449 = vadd.f32 %v337, %v448
  %v450 = vpop.f32.mrb[0].mxu0
  %451 = vmatprep.mubr.bf16.mxu0 0
  %452 = vmatmul.mubr.bf16.gmra.mrb[0].mxu0 %v288
  %v453 = vpop.f32.mrb[0].mxu0
  %v454 = vadd.f32 %v337, %v453
  %v455 = vpop.f32.mrb[0].mxu0
  %v456 = vpop.f32.mrb[0].mxu0
  %v457 = vadd.f32 %v337, %v456
  %v458 = vpop.f32.mrb[0].mxu0
  %459 = vmatprep.mubr.bf16.mxu0 0
  %460 = vmatmul.mubr.bf16.gmra.mrb[0].mxu0 %v289
  %v461 = vpop.f32.mrb[0].mxu0
  %v462 = vadd.f32 %v337, %v461
  %v463 = vpop.f32.mrb[0].mxu0
  %v464 = vpop.f32.mrb[0].mxu0
  %v465 = vadd.f32 %v337, %v464
  %v466 = vpop.f32.mrb[0].mxu0
  %467 = vmatprep.mubr.bf16.mxu0 0
  %468 = vmatmul.mubr.bf16.gmra.mrb[0].mxu0 %v290
  %v469 = vpop.f32.mrb[0].mxu0
  %v470 = vadd.f32 %v337, %v469
  %v471 = vpop.f32.mrb[0].mxu0
  %v472 = vpop.f32.mrb[0].mxu0
  %v473 = vadd.f32 %v337, %v472
  %v474 = vpop.f32.mrb[0].mxu0
  %475 = vmatprep.mubr.bf16.mxu0 0
  %476 = vmatmul.mubr.bf16.gmra.mrb[0].mxu0 %v291
  %v477 = vpop.f32.mrb[0].mxu0
  %v478 = vadd.f32 %v337, %v477
  %v479 = vpop.f32.mrb[0].mxu0
  %v480 = vpop.f32.mrb[0].mxu0
  %v481 = vadd.f32 %v337, %v480
  %v482 = vpop.f32.mrb[0].mxu0
  %483 = vmatprep.mubr.bf16.mxu0 0
  %484 = vmatmul.mubr.bf16.gmra.mrb[0].mxu0 %v292
  %v485 = vpop.f32.mrb[0].mxu0
  %v486 = vadd.f32 %v337, %v485
  %v487 = vpop.f32.mrb[0].mxu0
  %v488 = vpop.f32.mrb[0].mxu0
  %v489 = vadd.f32 %v337, %v488
  %v490 = vpop.f32.mrb[0].mxu0
  %491 = vmatprep.mubr.bf16.mxu0 0
  %492 = vmatmul.mubr.bf16.gmra.mrb[0].mxu0 %v293
  %v493 = vpop.f32.mrb[0].mxu0
  %v494 = vadd.f32 %v337, %v493
  %v495 = vpop.f32.mrb[0].mxu0
  %v496 = vpop.f32.mrb[0].mxu0
  %v497 = vadd.f32 %v337, %v496
  %v498 = vpop.f32.mrb[0].mxu0
  %499 = vmatprep.mubr.bf16.mxu0 0
  %500 = vmatmul.mubr.bf16.gmra.mrb[0].mxu0 %v294
  %v501 = vpop.f32.mrb[0].mxu0
  %v502 = vadd.f32 %v337, %v501
  %v503 = vpop.f32.mrb[0].mxu0
  %v504 = vpop.f32.mrb[0].mxu0
  %v505 = vadd.f32 %v337, %v504
  %v506 = vpop.f32.mrb[0].mxu0
  %507 = vmatprep.mubr.bf16.mxu0 0
  %508 = vmatmul.mubr.bf16.gmra.mrb[0].mxu0 %v295
  %v509 = vpop.f32.mrb[0].mxu0
  %v510 = vadd.f32 %v337, %v509
  %v511 = vpop.f32.mrb[0].mxu0
  %v512 = vpop.f32.mrb[0].mxu0
  %v513 = vadd.f32 %v337, %v512
  %v514 = vpop.f32.mrb[0].mxu0
  %515 = vmatprep.mubr.bf16.mxu0 0
  %516 = vmatmul.mubr.bf16.gmra.mrb[0].mxu0 %v296
  %v517 = vpop.f32.mrb[0].mxu0
  %v518 = vadd.f32 %v337, %v517
  %v519 = vpop.f32.mrb[0].mxu0
  %v520 = vpop.f32.mrb[0].mxu0
  %v521 = vadd.f32 %v337, %v520
  %v522 = vpop.f32.mrb[0].mxu0
  %523 = vmatprep.mubr.bf16.mxu0 0
  %524 = vmatmul.mubr.bf16.gmra.mrb[0].mxu0 %v297
  %v525 = vpop.f32.mrb[0].mxu0
  %v526 = vadd.f32 %v337, %v525
  %v527 = vpop.f32.mrb[0].mxu0
  %v528 = vpop.f32.mrb[0].mxu0
  %v529 = vadd.f32 %v337, %v528
  %v530 = vpop.f32.mrb[0].mxu0
  %531 = vmatprep.mubr.bf16.mxu0 0
  %532 = vmatmul.mubr.bf16.gmra.mrb[0].mxu0 %v298
  %v533 = vpop.f32.mrb[0].mxu0
  %v534 = vadd.f32 %v337, %v533
  %v535 = vpop.f32.mrb[0].mxu0
  %v536 = vpop.f32.mrb[0].mxu0
  %v537 = vadd.f32 %v337, %v536
  %v538 = vpop.f32.mrb[0].mxu0
  %539 = vmatprep.mubr.bf16.mxu0 0
  %540 = vmatmul.mubr.bf16.gmra.mrb[0].mxu0 %v299
  %v541 = vpop.f32.mrb[0].mxu0
  %v542 = vadd.f32 %v337, %v541
  %v543 = vpop.f32.mrb[0].mxu0
  %v544 = vpop.f32.mrb[0].mxu0
  %v545 = vadd.f32 %v337, %v544
  %v546 = vpop.f32.mrb[0].mxu0
  %547 = vmatprep.mubr.bf16.mxu0 0
  %548 = vmatmul.mubr.bf16.gmra.mrb[0].mxu0 %v300
  %v549 = vpop.f32.mrb[0].mxu0
  %v550 = vadd.f32 %v337, %v549
  %v551 = vpop.f32.mrb[0].mxu0
  %v552 = vpop.f32.mrb[0].mxu0
  %v553 = vadd.f32 %v337, %v552
  %v554 = vpop.f32.mrb[0].mxu0
  %555 = vmatprep.mubr.bf16.mxu0 0
  %556 = vmatmul.mubr.bf16.gmra.mrb[0].mxu0 %v301
  %v557 = vpop.f32.mrb[0].mxu0
  %v558 = vadd.f32 %v337, %v557
  %v559 = vpop.f32.mrb[0].mxu0
  %v560 = vpop.f32.mrb[0].mxu0
  %v561 = vadd.f32 %v337, %v560
  %v562 = vpop.f32.mrb[0].mxu0
  %563 = vmatprep.mubr.bf16.mxu0 0
  %564 = vmatmul.mubr.bf16.gmra.mrb[0].mxu0 %v302
  %v565 = vpop.f32.mrb[0].mxu0
  %v566 = vadd.f32 %v337, %v565
  %v567 = vpop.f32.mrb[0].mxu0
  %v568 = vpop.f32.mrb[0].mxu0
  %v569 = vadd.f32 %v337, %v568
  %v570 = vpop.f32.mrb[0].mxu0
  %571 = vmatprep.mubr.bf16.mxu0 0
  %572 = vmatmul.mubr.bf16.gmra.mrb[0].mxu0 %v303
  %v573 = vpop.f32.mrb[0].mxu0
  %v574 = vadd.f32 %v337, %v573
  %v575 = vpop.f32.mrb[0].mxu0
  %v576 = vpop.f32.mrb[0].mxu0
  %v577 = vadd.f32 %v337, %v576
  %v578 = vpop.f32.mrb[0].mxu0
  %579 = vmatprep.mubr.bf16.mxu0 0
  %580 = vmatmul.mubr.bf16.gmra.mrb[0].mxu0 %v304
  %v581 = vpop.f32.mrb[0].mxu0
  %v582 = vadd.f32 %v337, %v581
  %v583 = vpop.f32.mrb[0].mxu0
  %v584 = vpop.f32.mrb[0].mxu0
  %v585 = vadd.f32 %v337, %v584
  %v586 = vpop.f32.mrb[0].mxu0
  %587 = vmatprep.mubr.bf16.mxu0 0
  %588 = vmatmul.mubr.bf16.gmra.mrb[0].mxu0 %v305
  %v589 = vpop.f32.mrb[0].mxu0
  %v590 = vadd.f32 %v337, %v589
  %v591 = vpop.f32.mrb[0].mxu0
  %v592 = vpop.f32.mrb[0].mxu0
  %v593 = vadd.f32 %v337, %v592
  %v594 = vpop.f32.mrb[0].mxu0
  %595 = vmatprep.mubr.bf16.mxu0 0
  %596 = vmatmul.mubr.bf16.gmra.mrb[0].mxu0 %v306
  %v597 = vpop.f32.mrb[0].mxu0
  %v598 = vadd.f32 %v337, %v597
  %v599 = vpop.f32.mrb[0].mxu0
  %v600 = vpop.f32.mrb[0].mxu0
  %v601 = vadd.f32 %v337, %v600
  %v602 = vpop.f32.mrb[0].mxu0
  %603 = vmatprep.mubr.bf16.mxu0 0
  %604 = vmatmul.mubr.bf16.gmra.mrb[0].mxu0 %v307
  %v605 = vpop.f32.mrb[0].mxu0
  %v606 = vadd.f32 %v337, %v605
  %v607 = vpop.f32.mrb[0].mxu0
  %v608 = vpop.f32.mrb[0].mxu0
  %v609 = vadd.f32 %v337, %v608
  %v610 = vpop.f32.mrb[0].mxu0
  %611 = vmatprep.mubr.bf16.mxu0 0
  %612 = vmatmul.mubr.bf16.gmra.mrb[0].mxu0 %v308
  %v613 = vpop.f32.mrb[0].mxu0
  %v614 = vadd.f32 %v337, %v613
  %v615 = vpop.f32.mrb[0].mxu0
  %v616 = vpop.f32.mrb[0].mxu0
  %v617 = vadd.f32 %v337, %v616
  %v618 = vpop.f32.mrb[0].mxu0
  %619 = vmatprep.mubr.bf16.mxu0 0
  %620 = vmatmul.mubr.bf16.gmra.mrb[0].mxu0 %v309
  %v621 = vpop.f32.mrb[0].mxu0
  %v622 = vadd.f32 %v337, %v621
  %v623 = vpop.f32.mrb[0].mxu0
  %v624 = vpop.f32.mrb[0].mxu0
  %v625 = vadd.f32 %v337, %v624
  %v626 = vpop.f32.mrb[0].mxu0
  %627 = vmatprep.mubr.bf16.mxu0 0
  %628 = vmatmul.mubr.bf16.gmra.mrb[0].mxu0 %v310
  %v629 = vpop.f32.mrb[0].mxu0
  %v630 = vadd.f32 %v337, %v629
  %v631 = vpop.f32.mrb[0].mxu0
  %v632 = vpop.f32.mrb[0].mxu0
  %v633 = vadd.f32 %v337, %v632
  %v634 = vpop.f32.mrb[0].mxu0
  %635 = vmatprep.mubr.bf16.mxu0 0
  %636 = vmatmul.mubr.bf16.gmra.mrb[0].mxu0 %v311
  %v637 = vpop.f32.mrb[0].mxu0
  %v638 = vadd.f32 %v337, %v637
  %v639 = vpop.f32.mrb[0].mxu0
  %v640 = vpop.f32.mrb[0].mxu0
  %v641 = vadd.f32 %v337, %v640
  %v642 = vpop.f32.mrb[0].mxu0
  %643 = vmatprep.mubr.bf16.mxu0 0
  %644 = vmatmul.mubr.bf16.gmra.mrb[0].mxu0 %v312
  %v645 = vpop.f32.mrb[0].mxu0
  %v646 = vadd.f32 %v337, %v645
  %v647 = vpop.f32.mrb[0].mxu0
  %v648 = vpop.f32.mrb[0].mxu0
  %v649 = vadd.f32 %v337, %v648
  %v650 = vpop.f32.mrb[0].mxu0
  %651 = vmatprep.mubr.bf16.mxu0 0
  %652 = vmatmul.mubr.bf16.gmra.mrb[0].mxu0 %v313
  %v653 = vpop.f32.mrb[0].mxu0
  %v654 = vadd.f32 %v337, %v653
  %v655 = vpop.f32.mrb[0].mxu0
  %v656 = vpop.f32.mrb[0].mxu0
  %v657 = vadd.f32 %v337, %v656
  %v658 = vpop.f32.mrb[0].mxu0
  %659 = vmatprep.mubr.bf16.mxu0 0
  %660 = vmatmul.mubr.bf16.gmra.mrb[0].mxu0 %v314
  %v661 = vpop.f32.mrb[0].mxu0
  %v662 = vadd.f32 %v337, %v661
  %v663 = vpop.f32.mrb[0].mxu0
  %v664 = vpop.f32.mrb[0].mxu0
  %v665 = vadd.f32 %v337, %v664
  %v666 = vpop.f32.mrb[0].mxu0
  %667 = vmatprep.mubr.bf16.mxu0 0
  %668 = vmatmul.mubr.bf16.gmra.mrb[0].mxu0 %v315
  %v669 = vpop.f32.mrb[0].mxu0
  %v670 = vadd.f32 %v337, %v669
  %v671 = vpop.f32.mrb[0].mxu0
  %v672 = vpop.f32.mrb[0].mxu0
  %v673 = vadd.f32 %v337, %v672
  %v674 = vpop.f32.mrb[0].mxu0
  %675 = vdwg.mxu0
  %v676 = vmax.f32 %v422, 0.0
  %v677 = vmax.f32 %v425, 0.0
  %v678 = vmax.f32 %v430, 0.0
  %v679 = vmax.f32 %v433, 0.0
  %v680 = vmax.f32 %v438, 0.0
  %v681 = vmax.f32 %v441, 0.0
  %v682 = vmax.f32 %v446, 0.0
  %v683 = vmax.f32 %v449, 0.0
  %v684 = vmax.f32 %v454, 0.0
  %v685 = vmax.f32 %v457, 0.0
  %v686 = vmax.f32 %v462, 0.0
  %v687 = vmax.f32 %v465, 0.0
  %v688 = vmax.f32 %v470, 0.0
  %v689 = vmax.f32 %v473, 0.0
  %v690 = vmax.f32 %v478, 0.0
  %v691 = vmax.f32 %v481, 0.0
  %v692 = vmax.f32 %v486, 0.0
  %v693 = vmax.f32 %v489, 0.0
  %v694 = vmax.f32 %v494, 0.0
  %v695 = vmax.f32 %v497, 0.0
  %v696 = vmax.f32 %v502, 0.0
  %v697 = vmax.f32 %v505, 0.0
  %v698 = vmax.f32 %v510, 0.0
  %v699 = vmax.f32 %v513, 0.0
  %v700 = vmax.f32 %v518, 0.0
  %v701 = vmax.f32 %v521, 0.0
  %v702 = vmax.f32 %v526, 0.0
  %v703 = vmax.f32 %v529, 0.0
  %v704 = vmax.f32 %v534, 0.0
  %v705 = vmax.f32 %v537, 0.0
  %v706 = vmax.f32 %v542, 0.0
  %v707 = vmax.f32 %v545, 0.0
  %v708 = vmax.f32 %v550, 0.0
  %v709 = vmax.f32 %v553, 0.0
  %v710 = vmax.f32 %v558, 0.0
  %v711 = vmax.f32 %v561, 0.0
  %v712 = vmax.f32 %v566, 0.0
  %v713 = vmax.f32 %v569, 0.0
  %v714 = vmax.f32 %v574, 0.0
  %v715 = vmax.f32 %v577, 0.0
  %v716 = vmax.f32 %v582, 0.0
  %v717 = vmax.f32 %v585, 0.0
  %v718 = vmax.f32 %v590, 0.0
  %v719 = vmax.f32 %v593, 0.0
  %v720 = vmax.f32 %v598, 0.0
  %v721 = vmax.f32 %v601, 0.0
  %v722 = vmax.f32 %v606, 0.0
  %v723 = vmax.f32 %v609, 0.0
  %v724 = vmax.f32 %v614, 0.0
  %v725 = vmax.f32 %v617, 0.0
  %v726 = vmax.f32 %v622, 0.0
  %v727 = vmax.f32 %v625, 0.0
  %v728 = vmax.f32 %v630, 0.0
  %v729 = vmax.f32 %v633, 0.0
  %v730 = vmax.f32 %v638, 0.0
  %v731 = vmax.f32 %v641, 0.0
  %v732 = vmax.f32 %v646, 0.0
  %v733 = vmax.f32 %v649, 0.0
  %v734 = vmax.f32 %v654, 0.0
  %v735 = vmax.f32 %v657, 0.0
  %v736 = vmax.f32 %v662, 0.0
  %v737 = vmax.f32 %v665, 0.0
  %v738 = vmax.f32 %v670, 0.0
  %v739 = vmax.f32 %v673, 0.0
  %740 = vst [vmem:[#allocation3] sm:$0xff] 0.0
  %741 = vst [vmem:[#allocation3 + $0x8] sm:$0xff] 0.0
  %742 = vst [vmem:[#allocation3 + $0x10] sm:$0xff] 0.0
  %743 = vst [vmem:[#allocation3 + $0x18] sm:$0xff] 0.0
  %744 = vst [vmem:[#allocation3 + $0x240] sm:$0xff] 0.0
  %745 = vst [vmem:[#allocation3 + $0x248] sm:$0xff] 0.0
  %746 = vst [vmem:[#allocation3 + $0x250] sm:$0xff] 0.0
  %747 = vst [vmem:[#allocation3 + $0x258] sm:$0xff] 0.0
  %s748 = scalar_lea.vmem [#allocation3], 544
  %749 = vst [vmem:[%s748] sm:$0xff] 0.0
  %750 = vst [vmem:[%s748 + $0x8] sm:$0xff] 0.0
  %751 = vst [vmem:[%s748 + $0x10] sm:$0xff] 0.0
  %752 = vst [vmem:[%s748 + $0x18] sm:$0xff] 0.0
  %753 = vst [vmem:[%s748 + $0x240] sm:$0xff] 0.0
  %754 = vst [vmem:[%s748 + $0x248] sm:$0xff] 0.0
  %755 = vst [vmem:[%s748 + $0x250] sm:$0xff] 0.0
  %756 = vst [vmem:[%s748 + $0x258] sm:$0xff] 0.0
  %s757 = scalar_lea.vmem [#allocation3], 32
  %758 = vst [vmem:[%s757 + $0x7] sm:$0x1] 0.0
  %759 = vst [vmem:[%s757 + $0x27] sm:$0x1] 0.0
  %760 = vst [vmem:[%s757 + $0x47] sm:$0x1] 0.0
  %761 = vst [vmem:[%s757 + $0x67] sm:$0x1] 0.0
  %762 = vst [vmem:[%s757 + $0x87] sm:$0x1] 0.0
  %763 = vst [vmem:[%s757 + $0xa7] sm:$0x1] 0.0
  %764 = vst [vmem:[%s757 + $0xc7] sm:$0x1] 0.0
  %765 = vst [vmem:[%s757 + $0xe7] sm:$0x1] 0.0
  %766 = vst [vmem:[%s757 + $0x107] sm:$0x1] 0.0
  %767 = vst [vmem:[%s757 + $0x127] sm:$0x1] 0.0
  %768 = vst [vmem:[%s757 + $0x147] sm:$0x1] 0.0
  %769 = vst [vmem:[%s757 + $0x167] sm:$0x1] 0.0
  %770 = vst [vmem:[%s757 + $0x187] sm:$0x1] 0.0
  %771 = vst [vmem:[%s757 + $0x1a7] sm:$0x1] 0.0
  %772 = vst [vmem:[%s757 + $0x1c7] sm:$0x1] 0.0
  %773 = vst [vmem:[%s757 + $0x1e7] sm:$0x1] 0.0
  %774 = vst [vmem:[%s757 + $0x247] sm:$0x1] 0.0
  %775 = vst [vmem:[%s757 + $0x267] sm:$0x1] 0.0
  %776 = vst [vmem:[%s757 + $0x287] sm:$0x1] 0.0
  %777 = vst [vmem:[%s757 + $0x2a7] sm:$0x1] 0.0
  %778 = vst [vmem:[%s757 + $0x2c7] sm:$0x1] 0.0
  %779 = vst [vmem:[%s757 + $0x2e7] sm:$0x1] 0.0
  %780 = vst [vmem:[%s757 + $0x307] sm:$0x1] 0.0
  %781 = vst [vmem:[%s757 + $0x327] sm:$0x1] 0.0
  %782 = vst [vmem:[%s757 + $0x347] sm:$0x1] 0.0
  %783 = vst [vmem:[%s757 + $0x367] sm:$0x1] 0.0
  %784 = vst [vmem:[%s757 + $0x387] sm:$0x1] 0.0
  %785 = vst [vmem:[%s757 + $0x3a7] sm:$0x1] 0.0
  %786 = vst [vmem:[%s757 + $0x3c7] sm:$0x1] 0.0
  %787 = vst [vmem:[%s757 + $0x3e7] sm:$0x1] 0.0
  %788 = vst [vmem:[%s757 + $0x407] sm:$0x1] 0.0
  %789 = vst [vmem:[%s757 + $0x427] sm:$0x1] 0.0
  %790 = vst [vmem:[%s757 + $0x18] sm:$0x1] 0.0
  %791 = vst [vmem:[%s757 + $0x38] sm:$0x1] 0.0
  %792 = vst [vmem:[%s757 + $0x58] sm:$0x1] 0.0
  %793 = vst [vmem:[%s757 + $0x78] sm:$0x1] 0.0
  %794 = vst [vmem:[%s757 + $0x98] sm:$0x1] 0.0
  %795 = vst [vmem:[%s757 + $0xb8] sm:$0x1] 0.0
  %796 = vst [vmem:[%s757 + $0xd8] sm:$0x1] 0.0
  %797 = vst [vmem:[%s757 + $0xf8] sm:$0x1] 0.0
  %798 = vst [vmem:[%s757 + $0x118] sm:$0x1] 0.0
  %799 = vst [vmem:[%s757 + $0x138] sm:$0x1] 0.0
  %800 = vst [vmem:[%s757 + $0x158] sm:$0x1] 0.0
  %801 = vst [vmem:[%s757 + $0x178] sm:$0x1] 0.0
  %802 = vst [vmem:[%s757 + $0x198] sm:$0x1] 0.0
  %803 = vst [vmem:[%s757 + $0x1b8] sm:$0x1] 0.0
  %804 = vst [vmem:[%s757 + $0x1d8] sm:$0x1] 0.0
  %805 = vst [vmem:[%s757 + $0x1f8] sm:$0x1] 0.0
  %806 = vst [vmem:[%s757 + $0x258] sm:$0x1] 0.0
  %807 = vst [vmem:[%s757 + $0x278] sm:$0x1] 0.0
  %808 = vst [vmem:[%s757 + $0x298] sm:$0x1] 0.0
  %809 = vst [vmem:[%s757 + $0x2b8] sm:$0x1] 0.0
  %810 = vst [vmem:[%s757 + $0x2d8] sm:$0x1] 0.0
  %811 = vst [vmem:[%s757 + $0x2f8] sm:$0x1] 0.0
  %812 = vst [vmem:[%s757 + $0x318] sm:$0x1] 0.0
  %813 = vst [vmem:[%s757 + $0x338] sm:$0x1] 0.0
  %814 = vst [vmem:[%s757 + $0x358] sm:$0x1] 0.0
  %815 = vst [vmem:[%s757 + $0x378] sm:$0x1] 0.0
  %816 = vst [vmem:[%s757 + $0x398] sm:$0x1] 0.0
  %817 = vst [vmem:[%s757 + $0x3b8] sm:$0x1] 0.0
  %818 = vst [vmem:[%s757 + $0x3d8] sm:$0x1] 0.0
  %819 = vst [vmem:[%s757 + $0x3f8] sm:$0x1] 0.0
  %820 = vst [vmem:[%s757 + $0x418] sm:$0x1] 0.0
  %821 = vst [vmem:[%s757 + $0x438] sm:$0x1] 0.0
  %822 = vst [vmem:[%s757 + $0x8] sm:$0xff] %v676
  %823 = vst [vmem:[%s757 + $0x10] sm:$0xff] %v677
  %824 = vst [vmem:[%s757 + $0x28] sm:$0xff] %v678
  %825 = vst [vmem:[%s757 + $0x30] sm:$0xff] %v679
  %826 = vst [vmem:[%s757 + $0x48] sm:$0xff] %v680
  %827 = vst [vmem:[%s757 + $0x50] sm:$0xff] %v681
  %828 = vst [vmem:[%s757 + $0x68] sm:$0xff] %v682
  %829 = vst [vmem:[%s757 + $0x70] sm:$0xff] %v683
  %830 = vst [vmem:[%s757 + $0x88] sm:$0xff] %v684
  %831 = vst [vmem:[%s757 + $0x90] sm:$0xff] %v685
  %832 = vst [vmem:[%s757 + $0xa8] sm:$0xff] %v686
  %833 = vst [vmem:[%s757 + $0xb0] sm:$0xff] %v687
  %834 = vst [vmem:[%s757 + $0xc8] sm:$0xff] %v688
  %835 = vst [vmem:[%s757 + $0xd0] sm:$0xff] %v689
  %836 = vst [vmem:[%s757 + $0xe8] sm:$0xff] %v690
  %837 = vst [vmem:[%s757 + $0xf0] sm:$0xff] %v691
  %838 = vst [vmem:[%s757 + $0x108] sm:$0xff] %v692
  %839 = vst [vmem:[%s757 + $0x110] sm:$0xff] %v693
  %840 = vst [vmem:[%s757 + $0x128] sm:$0xff] %v694
  %841 = vst [vmem:[%s757 + $0x130] sm:$0xff] %v695
  %842 = vst [vmem:[%s757 + $0x148] sm:$0xff] %v696
  %843 = vst [vmem:[%s757 + $0x150] sm:$0xff] %v697
  %844 = vst [vmem:[%s757 + $0x168] sm:$0xff] %v698
  %845 = vst [vmem:[%s757 + $0x170] sm:$0xff] %v699
  %846 = vst [vmem:[%s757 + $0x188] sm:$0xff] %v700
  %847 = vst [vmem:[%s757 + $0x190] sm:$0xff] %v701
  %848 = vst [vmem:[%s757 + $0x1a8] sm:$0xff] %v702
  %849 = vst [vmem:[%s757 + $0x1b0] sm:$0xff] %v703
  %850 = vst [vmem:[%s757 + $0x1c8] sm:$0xff] %v704
  %851 = vst [vmem:[%s757 + $0x1d0] sm:$0xff] %v705
  %852 = vst [vmem:[%s757 + $0x1e8] sm:$0xff] %v706
  %853 = vst [vmem:[%s757 + $0x1f0] sm:$0xff] %v707
  %854 = vst [vmem:[%s757 + $0x248] sm:$0xff] %v708
  %855 = vst [vmem:[%s757 + $0x250] sm:$0xff] %v709
  %856 = vst [vmem:[%s757 + $0x268] sm:$0xff] %v710
  %857 = vst [vmem:[%s757 + $0x270] sm:$0xff] %v711
  %858 = vst [vmem:[%s757 + $0x288] sm:$0xff] %v712
  %859 = vst [vmem:[%s757 + $0x290] sm:$0xff] %v713
  %860 = vst [vmem:[%s757 + $0x2a8] sm:$0xff] %v714
  %861 = vst [vmem:[%s757 + $0x2b0] sm:$0xff] %v715
  %862 = vst [vmem:[%s757 + $0x2c8] sm:$0xff] %v716
  %863 = vst [vmem:[%s757 + $0x2d0] sm:$0xff] %v717
  %864 = vst [vmem:[%s757 + $0x2e8] sm:$0xff] %v718
  %865 = vst [vmem:[%s757 + $0x2f0] sm:$0xff] %v719
  %866 = vst [vmem:[%s757 + $0x308] sm:$0xff] %v720
  %867 = vst [vmem:[%s757 + $0x310] sm:$0xff] %v721
  %868 = vst [vmem:[%s757 + $0x328] sm:$0xff] %v722
  %869 = vst [vmem:[%s757 + $0x330] sm:$0xff] %v723
  %870 = vst [vmem:[%s757 + $0x348] sm:$0xff] %v724
  %871 = vst [vmem:[%s757 + $0x350] sm:$0xff] %v725
  %872 = vst [vmem:[%s757 + $0x368] sm:$0xff] %v726
  %873 = vst [vmem:[%s757 + $0x370] sm:$0xff] %v727
  %874 = vst [vmem:[%s757 + $0x388] sm:$0xff] %v728
  %875 = vst [vmem:[%s757 + $0x390] sm:$0xff] %v729
  %876 = vst [vmem:[%s757 + $0x3a8] sm:$0xff] %v730
  %877 = vst [vmem:[%s757 + $0x3b0] sm:$0xff] %v731
  %878 = vst [vmem:[%s757 + $0x3c8] sm:$0xff] %v732
  %879 = vst [vmem:[%s757 + $0x3d0] sm:$0xff] %v733
  %880 = vst [vmem:[%s757 + $0x3e8] sm:$0xff] %v734
  %881 = vst [vmem:[%s757 + $0x3f0] sm:$0xff] %v735
  %882 = vst [vmem:[%s757 + $0x408] sm:$0xff] %v736
  %883 = vst [vmem:[%s757 + $0x410] sm:$0xff] %v737
  %884 = vst [vmem:[%s757 + $0x428] sm:$0xff] %v738
  %885 = vst [vmem:[%s757 + $0x430] sm:$0xff] %v739
  %v886 = vld [vmem:[%s3] sm:$0xff]
  %v887 = vld [vmem:[%s3 + $0x8] sm:$0x1]
  %s888 = scalar_lea.vmem [#allocation3], 7
  %v889 = vld [vmem:[%s888] ss:$2 sm:$0xff]
  %s890 = scalar_lea.vmem [#allocation3], 71
  %v891 = vld [vmem:[%s890] ss:$2 sm:$0xff]
  %s892 = scalar_lea.vmem [#allocation3], 135
  %v893 = vld [vmem:[%s892] ss:$2 sm:$0xff]
  %s894 = scalar_lea.vmem [#allocation3], 199
  %v895 = vld [vmem:[%s894] ss:$2 sm:$0xff]
  %s896 = scalar_lea.vmem [#allocation3], 263
  %v897 = vld [vmem:[%s896] ss:$2 sm:$0xff]
  %s898 = scalar_lea.vmem [#allocation3], 327
  %v899 = vld [vmem:[%s898] ss:$2 sm:$0xff]
  %s900 = scalar_lea.vmem [#allocation3], 391
  %v901 = vld [vmem:[%s900] ss:$2 sm:$0xff]
  %s902 = scalar_lea.vmem [#allocation3], 455
  %v903 = vld [vmem:[%s902] ss:$2 sm:$0xff]
  %s904 = scalar_lea.vmem [#allocation3], 583
  %v905 = vld [vmem:[%s904] ss:$2 sm:$0xff]
  %s906 = scalar_lea.vmem [#allocation3], 647
  %v907 = vld [vmem:[%s906] ss:$2 sm:$0xff]
  %s908 = scalar_lea.vmem [#allocation3], 711
  %v909 = vld [vmem:[%s908] ss:$2 sm:$0xff]
  %s910 = scalar_lea.vmem [#allocation3], 775
  %v911 = vld [vmem:[%s910] ss:$2 sm:$0xff]
  %s912 = scalar_lea.vmem [#allocation3], 839
  %v913 = vld [vmem:[%s912] ss:$2 sm:$0xff]
  %s914 = scalar_lea.vmem [#allocation3], 903
  %v915 = vld [vmem:[%s914] ss:$2 sm:$0xff]
  %s916 = scalar_lea.vmem [#allocation3], 967
  %v917 = vld [vmem:[%s916] ss:$2 sm:$0xff]
  %s918 = scalar_lea.vmem [#allocation3], 1031
  %v919 = vld [vmem:[%s918] ss:$2 sm:$0xff]
  %v920 = vlaneseq
  %v921 = vshrl.u32 %v920, 7
  %v922 = vsub.s32 0, %v921
  %v923 = vrot.slane %v886, %v922
  %v924 = vmul.f32 %v889, %v923
  %v925 = vmul.f32 %v891, %v923
  %v926 = vmul.f32 %v893, %v923
  %v927 = vmul.f32 %v895, %v923
  %v928 = vmul.f32 %v897, %v923
  %v929 = vmul.f32 %v899, %v923
  %v930 = vmul.f32 %v901, %v923
  %v931 = vmul.f32 %v903, %v923
  %v932 = vmul.f32 %v905, %v923
  %v933 = vmul.f32 %v907, %v923
  %v934 = vmul.f32 %v909, %v923
  %v935 = vmul.f32 %v911, %v923
  %v936 = vmul.f32 %v913, %v923
  %v937 = vmul.f32 %v915, %v923
  %v938 = vmul.f32 %v917, %v923
  %v939 = vmul.f32 %v919, %v923
  %v940 = vadd.f32 %v924, 0.0
  %v941 = vadd.f32 %v925, 0.0
  %v942 = vadd.f32 %v926, 0.0
  %v943 = vadd.f32 %v927, 0.0
  %v944 = vadd.f32 %v928, 0.0
  %v945 = vadd.f32 %v929, 0.0
  %v946 = vadd.f32 %v930, 0.0
  %v947 = vadd.f32 %v931, 0.0
  %v948 = vadd.f32 %v932, 0.0
  %v949 = vadd.f32 %v933, 0.0
  %v950 = vadd.f32 %v934, 0.0
  %v951 = vadd.f32 %v935, 0.0
  %v952 = vadd.f32 %v936, 0.0
  %v953 = vadd.f32 %v937, 0.0
  %v954 = vadd.f32 %v938, 0.0
  %v955 = vadd.f32 %v939, 0.0
  %s956 = scalar_lea.vmem [#allocation3], 8
  %v957 = vld [vmem:[%s956] ss:$2 sm:$0xff]
  %s958 = scalar_lea.vmem [#allocation3], 72
  %v959 = vld [vmem:[%s958] ss:$2 sm:$0xff]
  %s960 = scalar_lea.vmem [#allocation3], 136
  %v961 = vld [vmem:[%s960] ss:$2 sm:$0xff]
  %s962 = scalar_lea.vmem [#allocation3], 200
  %v963 = vld [vmem:[%s962] ss:$2 sm:$0xff]
  %s964 = scalar_lea.vmem [#allocation3], 264
  %v965 = vld [vmem:[%s964] ss:$2 sm:$0xff]
  %s966 = scalar_lea.vmem [#allocation3], 328
  %v967 = vld [vmem:[%s966] ss:$2 sm:$0xff]
  %s968 = scalar_lea.vmem [#allocation3], 392
  %v969 = vld [vmem:[%s968] ss:$2 sm:$0xff]
  %s970 = scalar_lea.vmem [#allocation3], 456
  %v971 = vld [vmem:[%s970] ss:$2 sm:$0xff]
  %s972 = scalar_lea.vmem [#allocation3], 584
  %v973 = vld [vmem:[%s972] ss:$2 sm:$0xff]
  %s974 = scalar_lea.vmem [#allocation3], 648
  %v975 = vld [vmem:[%s974] ss:$2 sm:$0xff]
  %s976 = scalar_lea.vmem [#allocation3], 712
  %v977 = vld [vmem:[%s976] ss:$2 sm:$0xff]
  %s978 = scalar_lea.vmem [#allocation3], 776
  %v979 = vld [vmem:[%s978] ss:$2 sm:$0xff]
  %s980 = scalar_lea.vmem [#allocation3], 840
  %v981 = vld [vmem:[%s980] ss:$2 sm:$0xff]
  %s982 = scalar_lea.vmem [#allocation3], 904
  %v983 = vld [vmem:[%s982] ss:$2 sm:$0xff]
  %s984 = scalar_lea.vmem [#allocation3], 968
  %v985 = vld [vmem:[%s984] ss:$2 sm:$0xff]
  %s986 = scalar_lea.vmem [#allocation3], 1032
  %v987 = vld [vmem:[%s986] ss:$2 sm:$0xff]
  %v988 = vlaneseq
  %v989 = vshrl.u32 %v988, 7
  %v990 = vsub.s32 1, %v989
  %v991 = vrot.slane %v886, %v990
  %v992 = vmul.f32 %v957, %v991
  %v993 = vmul.f32 %v959, %v991
  %v994 = vmul.f32 %v961, %v991
  %v995 = vmul.f32 %v963, %v991
  %v996 = vmul.f32 %v965, %v991
  %v997 = vmul.f32 %v967, %v991
  %v998 = vmul.f32 %v969, %v991
  %v999 = vmul.f32 %v971, %v991
  %v1000 = vmul.f32 %v973, %v991
  %v1001 = vmul.f32 %v975, %v991
  %v1002 = vmul.f32 %v977, %v991
  %v1003 = vmul.f32 %v979, %v991
  %v1004 = vmul.f32 %v981, %v991
  %v1005 = vmul.f32 %v983, %v991
  %v1006 = vmul.f32 %v985, %v991
  %v1007 = vmul.f32 %v987, %v991
  %v1008 = vadd.f32 %v940, %v992
  %v1009 = vadd.f32 %v941, %v993
  %v1010 = vadd.f32 %v942, %v994
  %v1011 = vadd.f32 %v943, %v995
  %v1012 = vadd.f32 %v944, %v996
  %v1013 = vadd.f32 %v945, %v997
  %v1014 = vadd.f32 %v946, %v998
  %v1015 = vadd.f32 %v947, %v999
  %v1016 = vadd.f32 %v948, %v1000
  %v1017 = vadd.f32 %v949, %v1001
  %v1018 = vadd.f32 %v950, %v1002
  %v1019 = vadd.f32 %v951, %v1003
  %v1020 = vadd.f32 %v952, %v1004
  %v1021 = vadd.f32 %v953, %v1005
  %v1022 = vadd.f32 %v954, %v1006
  %v1023 = vadd.f32 %v955, %v1007
  %s1024 = scalar_lea.vmem [#allocation3], 9
  %v1025 = vld [vmem:[%s1024] ss:$2 sm:$0xff]
  %s1026 = scalar_lea.vmem [#allocation3], 73
  %v1027 = vld [vmem:[%s1026] ss:$2 sm:$0xff]
  %s1028 = scalar_lea.vmem [#allocation3], 137
  %v1029 = vld [vmem:[%s1028] ss:$2 sm:$0xff]
  %s1030 = scalar_lea.vmem [#allocation3], 201
  %v1031 = vld [vmem:[%s1030] ss:$2 sm:$0xff]
  %s1032 = scalar_lea.vmem [#allocation3], 265
  %v1033 = vld [vmem:[%s1032] ss:$2 sm:$0xff]
  %s1034 = scalar_lea.vmem [#allocation3], 329
  %v1035 = vld [vmem:[%s1034] ss:$2 sm:$0xff]
  %s1036 = scalar_lea.vmem [#allocation3], 393
  %v1037 = vld [vmem:[%s1036] ss:$2 sm:$0xff]
  %s1038 = scalar_lea.vmem [#allocation3], 457
  %v1039 = vld [vmem:[%s1038] ss:$2 sm:$0xff]
  %s1040 = scalar_lea.vmem [#allocation3], 585
  %v1041 = vld [vmem:[%s1040] ss:$2 sm:$0xff]
  %s1042 = scalar_lea.vmem [#allocation3], 649
  %v1043 = vld [vmem:[%s1042] ss:$2 sm:$0xff]
  %s1044 = scalar_lea.vmem [#allocation3], 713
  %v1045 = vld [vmem:[%s1044] ss:$2 sm:$0xff]
  %s1046 = scalar_lea.vmem [#allocation3], 777
  %v1047 = vld [vmem:[%s1046] ss:$2 sm:$0xff]
  %s1048 = scalar_lea.vmem [#allocation3], 841
  %v1049 = vld [vmem:[%s1048] ss:$2 sm:$0xff]
  %s1050 = scalar_lea.vmem [#allocation3], 905
  %v1051 = vld [vmem:[%s1050] ss:$2 sm:$0xff]
  %s1052 = scalar_lea.vmem [#allocation3], 969
  %v1053 = vld [vmem:[%s1052] ss:$2 sm:$0xff]
  %s1054 = scalar_lea.vmem [#allocation3], 1033
  %v1055 = vld [vmem:[%s1054] ss:$2 sm:$0xff]
  %v1056 = vlaneseq
  %v1057 = vshrl.u32 %v1056, 7
  %v1058 = vsub.s32 2, %v1057
  %v1059 = vrot.slane %v886, %v1058
  %v1060 = vmul.f32 %v1025, %v1059
  %v1061 = vmul.f32 %v1027, %v1059
  %v1062 = vmul.f32 %v1029, %v1059
  %v1063 = vmul.f32 %v1031, %v1059
  %v1064 = vmul.f32 %v1033, %v1059
  %v1065 = vmul.f32 %v1035, %v1059
  %v1066 = vmul.f32 %v1037, %v1059
  %v1067 = vmul.f32 %v1039, %v1059
  %v1068 = vmul.f32 %v1041, %v1059
  %v1069 = vmul.f32 %v1043, %v1059
  %v1070 = vmul.f32 %v1045, %v1059
  %v1071 = vmul.f32 %v1047, %v1059
  %v1072 = vmul.f32 %v1049, %v1059
  %v1073 = vmul.f32 %v1051, %v1059
  %v1074 = vmul.f32 %v1053, %v1059
  %v1075 = vmul.f32 %v1055, %v1059
  %v1076 = vadd.f32 %v1008, %v1060
  %v1077 = vadd.f32 %v1009, %v1061
  %v1078 = vadd.f32 %v1010, %v1062
  %v1079 = vadd.f32 %v1011, %v1063
  %v1080 = vadd.f32 %v1012, %v1064
  %v1081 = vadd.f32 %v1013, %v1065
  %v1082 = vadd.f32 %v1014, %v1066
  %v1083 = vadd.f32 %v1015, %v1067
  %v1084 = vadd.f32 %v1016, %v1068
  %v1085 = vadd.f32 %v1017, %v1069
  %v1086 = vadd.f32 %v1018, %v1070
  %v1087 = vadd.f32 %v1019, %v1071
  %v1088 = vadd.f32 %v1020, %v1072
  %v1089 = vadd.f32 %v1021, %v1073
  %v1090 = vadd.f32 %v1022, %v1074
  %v1091 = vadd.f32 %v1023, %v1075
  %s1092 = scalar_lea.vmem %s757, 7 [#allocation3]
  %v1093 = vld [vmem:[%s1092] ss:$2 sm:$0xff]
  %s1094 = scalar_lea.vmem %s757, 71 [#allocation3]
  %v1095 = vld [vmem:[%s1094] ss:$2 sm:$0xff]
  %s1096 = scalar_lea.vmem %s757, 135 [#allocation3]
  %v1097 = vld [vmem:[%s1096] ss:$2 sm:$0xff]
  %s1098 = scalar_lea.vmem %s757, 199 [#allocation3]
  %v1099 = vld [vmem:[%s1098] ss:$2 sm:$0xff]
  %s1100 = scalar_lea.vmem %s757, 263 [#allocation3]
  %v1101 = vld [vmem:[%s1100] ss:$2 sm:$0xff]
  %s1102 = scalar_lea.vmem %s757, 327 [#allocation3]
  %v1103 = vld [vmem:[%s1102] ss:$2 sm:$0xff]
  %s1104 = scalar_lea.vmem %s757, 391 [#allocation3]
  %v1105 = vld [vmem:[%s1104] ss:$2 sm:$0xff]
  %s1106 = scalar_lea.vmem %s757, 455 [#allocation3]
  %v1107 = vld [vmem:[%s1106] ss:$2 sm:$0xff]
  %s1108 = scalar_lea.vmem %s757, 583 [#allocation3]
  %v1109 = vld [vmem:[%s1108] ss:$2 sm:$0xff]
  %s1110 = scalar_lea.vmem %s757, 647 [#allocation3]
  %v1111 = vld [vmem:[%s1110] ss:$2 sm:$0xff]
  %s1112 = scalar_lea.vmem %s757, 711 [#allocation3]
  %v1113 = vld [vmem:[%s1112] ss:$2 sm:$0xff]
  %s1114 = scalar_lea.vmem %s757, 775 [#allocation3]
  %v1115 = vld [vmem:[%s1114] ss:$2 sm:$0xff]
  %s1116 = scalar_lea.vmem %s757, 839 [#allocation3]
  %v1117 = vld [vmem:[%s1116] ss:$2 sm:$0xff]
  %s1118 = scalar_lea.vmem %s757, 903 [#allocation3]
  %v1119 = vld [vmem:[%s1118] ss:$2 sm:$0xff]
  %s1120 = scalar_lea.vmem %s757, 967 [#allocation3]
  %v1121 = vld [vmem:[%s1120] ss:$2 sm:$0xff]
  %s1122 = scalar_lea.vmem %s757, 1031 [#allocation3]
  %v1123 = vld [vmem:[%s1122] ss:$2 sm:$0xff]
  %v1124 = vlaneseq
  %v1125 = vshrl.u32 %v1124, 7
  %v1126 = vsub.s32 3, %v1125
  %v1127 = vrot.slane %v886, %v1126
  %v1128 = vmul.f32 %v1093, %v1127
  %v1129 = vmul.f32 %v1095, %v1127
  %v1130 = vmul.f32 %v1097, %v1127
  %v1131 = vmul.f32 %v1099, %v1127
  %v1132 = vmul.f32 %v1101, %v1127
  %v1133 = vmul.f32 %v1103, %v1127
  %v1134 = vmul.f32 %v1105, %v1127
  %v1135 = vmul.f32 %v1107, %v1127
  %v1136 = vmul.f32 %v1109, %v1127
  %v1137 = vmul.f32 %v1111, %v1127
  %v1138 = vmul.f32 %v1113, %v1127
  %v1139 = vmul.f32 %v1115, %v1127
  %v1140 = vmul.f32 %v1117, %v1127
  %v1141 = vmul.f32 %v1119, %v1127
  %v1142 = vmul.f32 %v1121, %v1127
  %v1143 = vmul.f32 %v1123, %v1127
  %v1144 = vadd.f32 %v1076, %v1128
  %v1145 = vadd.f32 %v1077, %v1129
  %v1146 = vadd.f32 %v1078, %v1130
  %v1147 = vadd.f32 %v1079, %v1131
  %v1148 = vadd.f32 %v1080, %v1132
  %v1149 = vadd.f32 %v1081, %v1133
  %v1150 = vadd.f32 %v1082, %v1134
  %v1151 = vadd.f32 %v1083, %v1135
  %v1152 = vadd.f32 %v1084, %v1136
  %v1153 = vadd.f32 %v1085, %v1137
  %v1154 = vadd.f32 %v1086, %v1138
  %v1155 = vadd.f32 %v1087, %v1139
  %v1156 = vadd.f32 %v1088, %v1140
  %v1157 = vadd.f32 %v1089, %v1141
  %v1158 = vadd.f32 %v1090, %v1142
  %v1159 = vadd.f32 %v1091, %v1143
  %s1160 = scalar_lea.vmem %s757, 8 [#allocation3]
  %v1161 = vld [vmem:[%s1160] ss:$2 sm:$0xff]
  %s1162 = scalar_lea.vmem %s757, 72 [#allocation3]
  %v1163 = vld [vmem:[%s1162] ss:$2 sm:$0xff]
  %s1164 = scalar_lea.vmem %s757, 136 [#allocation3]
  %v1165 = vld [vmem:[%s1164] ss:$2 sm:$0xff]
  %s1166 = scalar_lea.vmem %s757, 200 [#allocation3]
  %v1167 = vld [vmem:[%s1166] ss:$2 sm:$0xff]
  %s1168 = scalar_lea.vmem %s757, 264 [#allocation3]
  %v1169 = vld [vmem:[%s1168] ss:$2 sm:$0xff]
  %s1170 = scalar_lea.vmem %s757, 328 [#allocation3]
  %v1171 = vld [vmem:[%s1170] ss:$2 sm:$0xff]
  %s1172 = scalar_lea.vmem %s757, 392 [#allocation3]
  %v1173 = vld [vmem:[%s1172] ss:$2 sm:$0xff]
  %s1174 = scalar_lea.vmem %s757, 456 [#allocation3]
  %v1175 = vld [vmem:[%s1174] ss:$2 sm:$0xff]
  %s1176 = scalar_lea.vmem %s757, 584 [#allocation3]
  %v1177 = vld [vmem:[%s1176] ss:$2 sm:$0xff]
  %s1178 = scalar_lea.vmem %s757, 648 [#allocation3]
  %v1179 = vld [vmem:[%s1178] ss:$2 sm:$0xff]
  %s1180 = scalar_lea.vmem %s757, 712 [#allocation3]
  %v1181 = vld [vmem:[%s1180] ss:$2 sm:$0xff]
  %s1182 = scalar_lea.vmem %s757, 776 [#allocation3]
  %v1183 = vld [vmem:[%s1182] ss:$2 sm:$0xff]
  %s1184 = scalar_lea.vmem %s757, 840 [#allocation3]
  %v1185 = vld [vmem:[%s1184] ss:$2 sm:$0xff]
  %s1186 = scalar_lea.vmem %s757, 904 [#allocation3]
  %v1187 = vld [vmem:[%s1186] ss:$2 sm:$0xff]
  %s1188 = scalar_lea.vmem %s757, 968 [#allocation3]
  %v1189 = vld [vmem:[%s1188] ss:$2 sm:$0xff]
  %s1190 = scalar_lea.vmem %s757, 1032 [#allocation3]
  %v1191 = vld [vmem:[%s1190] ss:$2 sm:$0xff]
  %v1192 = vlaneseq
  %v1193 = vshrl.u32 %v1192, 7
  %v1194 = vsub.s32 4, %v1193
  %v1195 = vrot.slane %v886, %v1194
  %v1196 = vmul.f32 %v1161, %v1195
  %v1197 = vmul.f32 %v1163, %v1195
  %v1198 = vmul.f32 %v1165, %v1195
  %v1199 = vmul.f32 %v1167, %v1195
  %v1200 = vmul.f32 %v1169, %v1195
  %v1201 = vmul.f32 %v1171, %v1195
  %v1202 = vmul.f32 %v1173, %v1195
  %v1203 = vmul.f32 %v1175, %v1195
  %v1204 = vmul.f32 %v1177, %v1195
  %v1205 = vmul.f32 %v1179, %v1195
  %v1206 = vmul.f32 %v1181, %v1195
  %v1207 = vmul.f32 %v1183, %v1195
  %v1208 = vmul.f32 %v1185, %v1195
  %v1209 = vmul.f32 %v1187, %v1195
  %v1210 = vmul.f32 %v1189, %v1195
  %v1211 = vmul.f32 %v1191, %v1195
  %v1212 = vadd.f32 %v1144, %v1196
  %v1213 = vadd.f32 %v1145, %v1197
  %v1214 = vadd.f32 %v1146, %v1198
  %v1215 = vadd.f32 %v1147, %v1199
  %v1216 = vadd.f32 %v1148, %v1200
  %v1217 = vadd.f32 %v1149, %v1201
  %v1218 = vadd.f32 %v1150, %v1202
  %v1219 = vadd.f32 %v1151, %v1203
  %v1220 = vadd.f32 %v1152, %v1204
  %v1221 = vadd.f32 %v1153, %v1205
  %v1222 = vadd.f32 %v1154, %v1206
  %v1223 = vadd.f32 %v1155, %v1207
  %v1224 = vadd.f32 %v1156, %v1208
  %v1225 = vadd.f32 %v1157, %v1209
  %v1226 = vadd.f32 %v1158, %v1210
  %v1227 = vadd.f32 %v1159, %v1211
  %s1228 = scalar_lea.vmem %s757, 9 [#allocation3]
  %v1229 = vld [vmem:[%s1228] ss:$2 sm:$0xff]
  %s1230 = scalar_lea.vmem %s757, 73 [#allocation3]
  %v1231 = vld [vmem:[%s1230] ss:$2 sm:$0xff]
  %s1232 = scalar_lea.vmem %s757, 137 [#allocation3]
  %v1233 = vld [vmem:[%s1232] ss:$2 sm:$0xff]
  %s1234 = scalar_lea.vmem %s757, 201 [#allocation3]
  %v1235 = vld [vmem:[%s1234] ss:$2 sm:$0xff]
  %s1236 = scalar_lea.vmem %s757, 265 [#allocation3]
  %v1237 = vld [vmem:[%s1236] ss:$2 sm:$0xff]
  %s1238 = scalar_lea.vmem %s757, 329 [#allocation3]
  %v1239 = vld [vmem:[%s1238] ss:$2 sm:$0xff]
  %s1240 = scalar_lea.vmem %s757, 393 [#allocation3]
  %v1241 = vld [vmem:[%s1240] ss:$2 sm:$0xff]
  %s1242 = scalar_lea.vmem %s757, 457 [#allocation3]
  %v1243 = vld [vmem:[%s1242] ss:$2 sm:$0xff]
  %s1244 = scalar_lea.vmem %s757, 585 [#allocation3]
  %v1245 = vld [vmem:[%s1244] ss:$2 sm:$0xff]
  %s1246 = scalar_lea.vmem %s757, 649 [#allocation3]
  %v1247 = vld [vmem:[%s1246] ss:$2 sm:$0xff]
  %s1248 = scalar_lea.vmem %s757, 713 [#allocation3]
  %v1249 = vld [vmem:[%s1248] ss:$2 sm:$0xff]
  %s1250 = scalar_lea.vmem %s757, 777 [#allocation3]
  %v1251 = vld [vmem:[%s1250] ss:$2 sm:$0xff]
  %s1252 = scalar_lea.vmem %s757, 841 [#allocation3]
  %v1253 = vld [vmem:[%s1252] ss:$2 sm:$0xff]
  %s1254 = scalar_lea.vmem %s757, 905 [#allocation3]
  %v1255 = vld [vmem:[%s1254] ss:$2 sm:$0xff]
  %s1256 = scalar_lea.vmem %s757, 969 [#allocation3]
  %v1257 = vld [vmem:[%s1256] ss:$2 sm:$0xff]
  %s1258 = scalar_lea.vmem %s757, 1033 [#allocation3]
  %v1259 = vld [vmem:[%s1258] ss:$2 sm:$0xff]
  %v1260 = vlaneseq
  %v1261 = vshrl.u32 %v1260, 7
  %v1262 = vsub.s32 5, %v1261
  %v1263 = vrot.slane %v886, %v1262
  %v1264 = vmul.f32 %v1229, %v1263
  %v1265 = vmul.f32 %v1231, %v1263
  %v1266 = vmul.f32 %v1233, %v1263
  %v1267 = vmul.f32 %v1235, %v1263
  %v1268 = vmul.f32 %v1237, %v1263
  %v1269 = vmul.f32 %v1239, %v1263
  %v1270 = vmul.f32 %v1241, %v1263
  %v1271 = vmul.f32 %v1243, %v1263
  %v1272 = vmul.f32 %v1245, %v1263
  %v1273 = vmul.f32 %v1247, %v1263
  %v1274 = vmul.f32 %v1249, %v1263
  %v1275 = vmul.f32 %v1251, %v1263
  %v1276 = vmul.f32 %v1253, %v1263
  %v1277 = vmul.f32 %v1255, %v1263
  %v1278 = vmul.f32 %v1257, %v1263
  %v1279 = vmul.f32 %v1259, %v1263
  %v1280 = vadd.f32 %v1212, %v1264
  %v1281 = vadd.f32 %v1213, %v1265
  %v1282 = vadd.f32 %v1214, %v1266
  %v1283 = vadd.f32 %v1215, %v1267
  %v1284 = vadd.f32 %v1216, %v1268
  %v1285 = vadd.f32 %v1217, %v1269
  %v1286 = vadd.f32 %v1218, %v1270
  %v1287 = vadd.f32 %v1219, %v1271
  %v1288 = vadd.f32 %v1220, %v1272
  %v1289 = vadd.f32 %v1221, %v1273
  %v1290 = vadd.f32 %v1222, %v1274
  %v1291 = vadd.f32 %v1223, %v1275
  %v1292 = vadd.f32 %v1224, %v1276
  %v1293 = vadd.f32 %v1225, %v1277
  %v1294 = vadd.f32 %v1226, %v1278
  %v1295 = vadd.f32 %v1227, %v1279
  %s1296 = scalar_lea.vmem [#allocation3], 64
  %s1297 = scalar_lea.vmem %s1296, 7 [#allocation3]
  %v1298 = vld [vmem:[%s1297] ss:$2 sm:$0xff]
  %s1299 = scalar_lea.vmem %s1296, 71 [#allocation3]
  %v1300 = vld [vmem:[%s1299] ss:$2 sm:$0xff]
  %s1301 = scalar_lea.vmem %s1296, 135 [#allocation3]
  %v1302 = vld [vmem:[%s1301] ss:$2 sm:$0xff]
  %s1303 = scalar_lea.vmem %s1296, 199 [#allocation3]
  %v1304 = vld [vmem:[%s1303] ss:$2 sm:$0xff]
  %s1305 = scalar_lea.vmem %s1296, 263 [#allocation3]
  %v1306 = vld [vmem:[%s1305] ss:$2 sm:$0xff]
  %s1307 = scalar_lea.vmem %s1296, 327 [#allocation3]
  %v1308 = vld [vmem:[%s1307] ss:$2 sm:$0xff]
  %s1309 = scalar_lea.vmem %s1296, 391 [#allocation3]
  %v1310 = vld [vmem:[%s1309] ss:$2 sm:$0xff]
  %s1311 = scalar_lea.vmem %s1296, 455 [#allocation3]
  %v1312 = vld [vmem:[%s1311] ss:$2 sm:$0xff]
  %s1313 = scalar_lea.vmem %s1296, 583 [#allocation3]
  %v1314 = vld [vmem:[%s1313] ss:$2 sm:$0xff]
  %s1315 = scalar_lea.vmem %s1296, 647 [#allocation3]
  %v1316 = vld [vmem:[%s1315] ss:$2 sm:$0xff]
  %s1317 = scalar_lea.vmem %s1296, 711 [#allocation3]
  %v1318 = vld [vmem:[%s1317] ss:$2 sm:$0xff]
  %s1319 = scalar_lea.vmem %s1296, 775 [#allocation3]
  %v1320 = vld [vmem:[%s1319] ss:$2 sm:$0xff]
  %s1321 = scalar_lea.vmem %s1296, 839 [#allocation3]
  %v1322 = vld [vmem:[%s1321] ss:$2 sm:$0xff]
  %s1323 = scalar_lea.vmem %s1296, 903 [#allocation3]
  %v1324 = vld [vmem:[%s1323] ss:$2 sm:$0xff]
  %s1325 = scalar_lea.vmem %s1296, 967 [#allocation3]
  %v1326 = vld [vmem:[%s1325] ss:$2 sm:$0xff]
  %s1327 = scalar_lea.vmem %s1296, 1031 [#allocation3]
  %v1328 = vld [vmem:[%s1327] ss:$2 sm:$0xff]
  %v1329 = vlaneseq
  %v1330 = vshrl.u32 %v1329, 7
  %v1331 = vsub.s32 6, %v1330
  %v1332 = vrot.slane %v886, %v1331
  %v1333 = vmul.f32 %v1298, %v1332
  %v1334 = vmul.f32 %v1300, %v1332
  %v1335 = vmul.f32 %v1302, %v1332
  %v1336 = vmul.f32 %v1304, %v1332
  %v1337 = vmul.f32 %v1306, %v1332
  %v1338 = vmul.f32 %v1308, %v1332
  %v1339 = vmul.f32 %v1310, %v1332
  %v1340 = vmul.f32 %v1312, %v1332
  %v1341 = vmul.f32 %v1314, %v1332
  %v1342 = vmul.f32 %v1316, %v1332
  %v1343 = vmul.f32 %v1318, %v1332
  %v1344 = vmul.f32 %v1320, %v1332
  %v1345 = vmul.f32 %v1322, %v1332
  %v1346 = vmul.f32 %v1324, %v1332
  %v1347 = vmul.f32 %v1326, %v1332
  %v1348 = vmul.f32 %v1328, %v1332
  %v1349 = vadd.f32 %v1280, %v1333
  %v1350 = vadd.f32 %v1281, %v1334
  %v1351 = vadd.f32 %v1282, %v1335
  %v1352 = vadd.f32 %v1283, %v1336
  %v1353 = vadd.f32 %v1284, %v1337
  %v1354 = vadd.f32 %v1285, %v1338
  %v1355 = vadd.f32 %v1286, %v1339
  %v1356 = vadd.f32 %v1287, %v1340
  %v1357 = vadd.f32 %v1288, %v1341
  %v1358 = vadd.f32 %v1289, %v1342
  %v1359 = vadd.f32 %v1290, %v1343
  %v1360 = vadd.f32 %v1291, %v1344
  %v1361 = vadd.f32 %v1292, %v1345
  %v1362 = vadd.f32 %v1293, %v1346
  %v1363 = vadd.f32 %v1294, %v1347
  %v1364 = vadd.f32 %v1295, %v1348
  %s1365 = scalar_lea.vmem %s1296, 8 [#allocation3]
  %v1366 = vld [vmem:[%s1365] ss:$2 sm:$0xff]
  %s1367 = scalar_lea.vmem %s1296, 72 [#allocation3]
  %v1368 = vld [vmem:[%s1367] ss:$2 sm:$0xff]
  %s1369 = scalar_lea.vmem %s1296, 136 [#allocation3]
  %v1370 = vld [vmem:[%s1369] ss:$2 sm:$0xff]
  %s1371 = scalar_lea.vmem %s1296, 200 [#allocation3]
  %v1372 = vld [vmem:[%s1371] ss:$2 sm:$0xff]
  %s1373 = scalar_lea.vmem %s1296, 264 [#allocation3]
  %v1374 = vld [vmem:[%s1373] ss:$2 sm:$0xff]
  %s1375 = scalar_lea.vmem %s1296, 328 [#allocation3]
  %v1376 = vld [vmem:[%s1375] ss:$2 sm:$0xff]
  %s1377 = scalar_lea.vmem %s1296, 392 [#allocation3]
  %v1378 = vld [vmem:[%s1377] ss:$2 sm:$0xff]
  %s1379 = scalar_lea.vmem %s1296, 456 [#allocation3]
  %v1380 = vld [vmem:[%s1379] ss:$2 sm:$0xff]
  %s1381 = scalar_lea.vmem %s1296, 584 [#allocation3]
  %v1382 = vld [vmem:[%s1381] ss:$2 sm:$0xff]
  %s1383 = scalar_lea.vmem %s1296, 648 [#allocation3]
  %v1384 = vld [vmem:[%s1383] ss:$2 sm:$0xff]
  %s1385 = scalar_lea.vmem %s1296, 712 [#allocation3]
  %v1386 = vld [vmem:[%s1385] ss:$2 sm:$0xff]
  %s1387 = scalar_lea.vmem %s1296, 776 [#allocation3]
  %v1388 = vld [vmem:[%s1387] ss:$2 sm:$0xff]
  %s1389 = scalar_lea.vmem %s1296, 840 [#allocation3]
  %v1390 = vld [vmem:[%s1389] ss:$2 sm:$0xff]
  %s1391 = scalar_lea.vmem %s1296, 904 [#allocation3]
  %v1392 = vld [vmem:[%s1391] ss:$2 sm:$0xff]
  %s1393 = scalar_lea.vmem %s1296, 968 [#allocation3]
  %v1394 = vld [vmem:[%s1393] ss:$2 sm:$0xff]
  %s1395 = scalar_lea.vmem %s1296, 1032 [#allocation3]
  %v1396 = vld [vmem:[%s1395] ss:$2 sm:$0xff]
  %v1397 = vlaneseq
  %v1398 = vshrl.u32 %v1397, 7
  %v1399 = vsub.s32 7, %v1398
  %v1400 = vrot.slane %v886, %v1399
  %v1401 = vmul.f32 %v1366, %v1400
  %v1402 = vmul.f32 %v1368, %v1400
  %v1403 = vmul.f32 %v1370, %v1400
  %v1404 = vmul.f32 %v1372, %v1400
  %v1405 = vmul.f32 %v1374, %v1400
  %v1406 = vmul.f32 %v1376, %v1400
  %v1407 = vmul.f32 %v1378, %v1400
  %v1408 = vmul.f32 %v1380, %v1400
  %v1409 = vmul.f32 %v1382, %v1400
  %v1410 = vmul.f32 %v1384, %v1400
  %v1411 = vmul.f32 %v1386, %v1400
  %v1412 = vmul.f32 %v1388, %v1400
  %v1413 = vmul.f32 %v1390, %v1400
  %v1414 = vmul.f32 %v1392, %v1400
  %v1415 = vmul.f32 %v1394, %v1400
  %v1416 = vmul.f32 %v1396, %v1400
  %v1417 = vadd.f32 %v1349, %v1401
  %v1418 = vadd.f32 %v1350, %v1402
  %v1419 = vadd.f32 %v1351, %v1403
  %v1420 = vadd.f32 %v1352, %v1404
  %v1421 = vadd.f32 %v1353, %v1405
  %v1422 = vadd.f32 %v1354, %v1406
  %v1423 = vadd.f32 %v1355, %v1407
  %v1424 = vadd.f32 %v1356, %v1408
  %v1425 = vadd.f32 %v1357, %v1409
  %v1426 = vadd.f32 %v1358, %v1410
  %v1427 = vadd.f32 %v1359, %v1411
  %v1428 = vadd.f32 %v1360, %v1412
  %v1429 = vadd.f32 %v1361, %v1413
  %v1430 = vadd.f32 %v1362, %v1414
  %v1431 = vadd.f32 %v1363, %v1415
  %v1432 = vadd.f32 %v1364, %v1416
  %s1433 = scalar_lea.vmem %s1296, 9 [#allocation3]
  %v1434 = vld [vmem:[%s1433] ss:$2 sm:$0xff]
  %s1435 = scalar_lea.vmem %s1296, 73 [#allocation3]
  %v1436 = vld [vmem:[%s1435] ss:$2 sm:$0xff]
  %s1437 = scalar_lea.vmem %s1296, 137 [#allocation3]
  %v1438 = vld [vmem:[%s1437] ss:$2 sm:$0xff]
  %s1439 = scalar_lea.vmem %s1296, 201 [#allocation3]
  %v1440 = vld [vmem:[%s1439] ss:$2 sm:$0xff]
  %s1441 = scalar_lea.vmem %s1296, 265 [#allocation3]
  %v1442 = vld [vmem:[%s1441] ss:$2 sm:$0xff]
  %s1443 = scalar_lea.vmem %s1296, 329 [#allocation3]
  %v1444 = vld [vmem:[%s1443] ss:$2 sm:$0xff]
  %s1445 = scalar_lea.vmem %s1296, 393 [#allocation3]
  %v1446 = vld [vmem:[%s1445] ss:$2 sm:$0xff]
  %s1447 = scalar_lea.vmem %s1296, 457 [#allocation3]
  %v1448 = vld [vmem:[%s1447] ss:$2 sm:$0xff]
  %s1449 = scalar_lea.vmem %s1296, 585 [#allocation3]
  %v1450 = vld [vmem:[%s1449] ss:$2 sm:$0xff]
  %s1451 = scalar_lea.vmem %s1296, 649 [#allocation3]
  %v1452 = vld [vmem:[%s1451] ss:$2 sm:$0xff]
  %s1453 = scalar_lea.vmem %s1296, 713 [#allocation3]
  %v1454 = vld [vmem:[%s1453] ss:$2 sm:$0xff]
  %s1455 = scalar_lea.vmem %s1296, 777 [#allocation3]
  %v1456 = vld [vmem:[%s1455] ss:$2 sm:$0xff]
  %s1457 = scalar_lea.vmem %s1296, 841 [#allocation3]
  %v1458 = vld [vmem:[%s1457] ss:$2 sm:$0xff]
  %s1459 = scalar_lea.vmem %s1296, 905 [#allocation3]
  %v1460 = vld [vmem:[%s1459] ss:$2 sm:$0xff]
  %s1461 = scalar_lea.vmem %s1296, 969 [#allocation3]
  %v1462 = vld [vmem:[%s1461] ss:$2 sm:$0xff]
  %s1463 = scalar_lea.vmem %s1296, 1033 [#allocation3]
  %v1464 = vld [vmem:[%s1463] ss:$2 sm:$0xff]
  %v1465 = vlaneseq
  %v1466 = vshrl.u32 %v1465, 7
  %v1467 = vsub.s32 0, %v1466
  %v1468 = vrot.slane %v887, %v1467
  %v1469 = vmul.f32 %v1434, %v1468
  %v1470 = vmul.f32 %v1436, %v1468
  %v1471 = vmul.f32 %v1438, %v1468
  %v1472 = vmul.f32 %v1440, %v1468
  %v1473 = vmul.f32 %v1442, %v1468
  %v1474 = vmul.f32 %v1444, %v1468
  %v1475 = vmul.f32 %v1446, %v1468
  %v1476 = vmul.f32 %v1448, %v1468
  %v1477 = vmul.f32 %v1450, %v1468
  %v1478 = vmul.f32 %v1452, %v1468
  %v1479 = vmul.f32 %v1454, %v1468
  %v1480 = vmul.f32 %v1456, %v1468
  %v1481 = vmul.f32 %v1458, %v1468
  %v1482 = vmul.f32 %v1460, %v1468
  %v1483 = vmul.f32 %v1462, %v1468
  %v1484 = vmul.f32 %v1464, %v1468
  %v1485 = vadd.f32 %v1417, %v1469
  %v1486 = vadd.f32 %v1418, %v1470
  %v1487 = vadd.f32 %v1419, %v1471
  %v1488 = vadd.f32 %v1420, %v1472
  %v1489 = vadd.f32 %v1421, %v1473
  %v1490 = vadd.f32 %v1422, %v1474
  %v1491 = vadd.f32 %v1423, %v1475
  %v1492 = vadd.f32 %v1424, %v1476
  %v1493 = vadd.f32 %v1425, %v1477
  %v1494 = vadd.f32 %v1426, %v1478
  %v1495 = vadd.f32 %v1427, %v1479
  %v1496 = vadd.f32 %v1428, %v1480
  %v1497 = vadd.f32 %v1429, %v1481
  %v1498 = vadd.f32 %v1430, %v1482
  %v1499 = vadd.f32 %v1431, %v1483
  %v1500 = vadd.f32 %v1432, %v1484
  %v1501 = vld [vmem:[%s4] sm:$0x1]
  %v1503 = vlaneseq
  %v1504 = vshrl.u32 %v1503, 7
  %v1505 = vsub.s32 0, %v1504
  %v1506 = vrot.slane %v1501, %v1505
  %v1508 = vadd.f32 %v1485, %v1506
  %v1509 = vadd.f32 %v1486, %v1506
  %v1510 = vadd.f32 %v1487, %v1506
  %v1511 = vadd.f32 %v1488, %v1506
  %v1512 = vadd.f32 %v1489, %v1506
  %v1513 = vadd.f32 %v1490, %v1506
  %v1514 = vadd.f32 %v1491, %v1506
  %v1515 = vadd.f32 %v1492, %v1506
  %v1516 = vadd.f32 %v1493, %v1506
  %v1517 = vadd.f32 %v1494, %v1506
  %v1518 = vadd.f32 %v1495, %v1506
  %v1519 = vadd.f32 %v1496, %v1506
  %v1520 = vadd.f32 %v1497, %v1506
  %v1521 = vadd.f32 %v1498, %v1506
  %v1522 = vadd.f32 %v1499, %v1506
  %v1523 = vadd.f32 %v1500, %v1506
  %v1524 = vmax.f32 %v1508, 0.0
  %v1525 = vmax.f32 %v1509, 0.0
  %v1526 = vmax.f32 %v1510, 0.0
  %v1527 = vmax.f32 %v1511, 0.0
  %v1528 = vmax.f32 %v1512, 0.0
  %v1529 = vmax.f32 %v1513, 0.0
  %v1530 = vmax.f32 %v1514, 0.0
  %v1531 = vmax.f32 %v1515, 0.0
  %v1532 = vmax.f32 %v1516, 0.0
  %v1533 = vmax.f32 %v1517, 0.0
  %v1534 = vmax.f32 %v1518, 0.0
  %v1535 = vmax.f32 %v1519, 0.0
  %v1536 = vmax.f32 %v1520, 0.0
  %v1537 = vmax.f32 %v1521, 0.0
  %v1538 = vmax.f32 %v1522, 0.0
  %v1539 = vmax.f32 %v1523, 0.0
  %v1540 = vpack.c.bf16 %v1525, %v1524
  %v1541 = vpack.c.bf16 %v1527, %v1526
  %v1542 = vpack.c.bf16 %v1529, %v1528
  %v1543 = vpack.c.bf16 %v1531, %v1530
  %v1544 = vpack.c.bf16 %v1533, %v1532
  %v1545 = vpack.c.bf16 %v1535, %v1534
  %v1546 = vpack.c.bf16 %v1537, %v1536
  %v1547 = vpack.c.bf16 %v1539, %v1538
  %v1548 = vld [vmem:[%s5] sm:$0xf]
  %v1549 = vld [vmem:[%s5 + $0x4] sm:$0xf]
  %v1550 = vld [vmem:[%s5 + $0x8] sm:$0xf]
  %v1551 = vld [vmem:[%s5 + $0xc] sm:$0xf]
  %v1552 = vld [vmem:[%s5 + $0x10] sm:$0xf]
  %v1553 = vld [vmem:[%s5 + $0x14] sm:$0xf]
  %v1554 = vld [vmem:[%s5 + $0x18] sm:$0xf]
  %v1555 = vld [vmem:[%s5 + $0x1c] sm:$0xf]
  %v1556 = vld [vmem:[%s5 + $0x20] sm:$0xf]
  %v1557 = vld [vmem:[%s5 + $0x24] sm:$0xf]
  %v1558 = vld [vmem:[%s5 + $0x28] sm:$0xf]
  %v1559 = vld [vmem:[%s5 + $0x2c] sm:$0xf]
  %v1560 = vld [vmem:[%s5 + $0x30] sm:$0xf]
  %v1561 = vld [vmem:[%s5 + $0x34] sm:$0xf]
  %v1562 = vld [vmem:[%s5 + $0x38] sm:$0xf]
  %v1563 = vld [vmem:[%s5 + $0x3c] sm:$0xf]
  %v1564 = vld [vmem:[%s6] sm:$0x1]
  %v1566 = vlaneseq
  %v1567 = vshrl.u32 %v1566, 7
  %v1568 = vsub.s32 0, %v1567
  %v1569 = vrot.slane %v1564, %v1568
  %v1587 = vunpack.c.l.b16 %v1548
  %v1588 = vunpack.c.l.b16 %v1549
  %v1589 = vunpack.c.l.b16 %v1550
  %v1590 = vunpack.c.l.b16 %v1551
  %v1591 = vunpack.c.l.b16 %v1552
  %v1592 = vunpack.c.l.b16 %v1553
  %v1593 = vunpack.c.l.b16 %v1554
  %v1594 = vunpack.c.l.b16 %v1555
  %v1595 = vunpack.c.l.b16 %v1556
  %v1596 = vunpack.c.l.b16 %v1557
  %v1597 = vunpack.c.l.b16 %v1558
  %v1598 = vunpack.c.l.b16 %v1559
  %v1599 = vunpack.c.l.b16 %v1560
  %v1600 = vunpack.c.l.b16 %v1561
  %v1601 = vunpack.c.l.b16 %v1562
  %v1602 = vunpack.c.l.b16 %v1563
  %v1603 = vpack.c.b16 %v1588, %v1587
  %v1604 = vpack.c.b16 %v1590, %v1589
  %v1605 = vpack.c.b16 %v1592, %v1591
  %v1606 = vpack.c.b16 %v1594, %v1593
  %v1607 = vpack.c.b16 %v1596, %v1595
  %v1608 = vpack.c.b16 %v1598, %v1597
  %v1609 = vpack.c.b16 %v1600, %v1599
  %v1610 = vpack.c.b16 %v1602, %v1601
  %1619 = vmatprep.subr.bf16.mxu0 0
  %1620 = vmatpush1.bf16.msra.mxu0 %v1603
  %1621 = vmatprep.subr.bf16.mxu0 0
  %1622 = vmatpush1.bf16.msra.mxu0 %v1604
  %1623 = vmatprep.subr.bf16.mxu0 0
  %1624 = vmatpush1.bf16.msra.mxu0 %v1605
  %1625 = vmatprep.subr.bf16.mxu0 0
  %1626 = vmatpush1.bf16.msra.mxu0 %v1606
  %1627 = vmatprep.subr.bf16.mxu0 0
  %1628 = vmatpush1.bf16.msra.mxu0 %v1607
  %1629 = vmatprep.subr.bf16.mxu0 0
  %1630 = vmatpush1.bf16.msra.mxu0 %v1608
  %1631 = vmatprep.subr.bf16.mxu0 0
  %1632 = vmatpush1.bf16.msra.mxu0 %v1609
  %1633 = vmatprep.subr.bf16.mxu0 0
  %1634 = vmatpush1.bf16.msra.mxu0 %v1610
  %1635 = vmatprep.subr.bf16.mxu0 0
  %1636 = vmatpush1.bf16.msra.mxu0 0
  %1637 = vmatprep.subr.bf16.mxu0 0
  %1638 = vmatpush1.bf16.msra.mxu0 0
  %1639 = vmatprep.subr.bf16.mxu0 0
  %1640 = vmatpush1.bf16.msra.mxu0 0
  %1641 = vmatprep.subr.bf16.mxu0 0
  %1642 = vmatpush1.bf16.msra.mxu0 0
  %1643 = vmatprep.subr.bf16.mxu0 0
  %1644 = vmatpush1.bf16.msra.mxu0 0
  %1645 = vmatprep.subr.bf16.mxu0 0
  %1646 = vmatpush1.bf16.msra.mxu0 0
  %1647 = vmatprep.subr.bf16.mxu0 0
  %1648 = vmatpush1.bf16.msra.mxu0 0
  %1649 = vmatprep.subr.bf16.mxu0 0
  %1650 = vmatpush1.bf16.msra.mxu0 0
  %1651 = vmatprep.mubr.bf16.mxu0 0
  %1652 = vmatmul.mubr.bf16.gmra.mrb[0].mxu0 %v1540
  %v1653 = vpop.f32.mrb[0].mxu0
  %v1654 = vadd.f32 %v1569, %v1653
  %v1655 = vpop.f32.mrb[0].mxu0
  %v1656 = vpop.f32.mrb[0].mxu0
  %v1657 = vadd.f32 %v1569, %v1656
  %v1658 = vpop.f32.mrb[0].mxu0
  %1659 = vmatprep.mubr.bf16.mxu0 0
  %1660 = vmatmul.mubr.bf16.gmra.mrb[0].mxu0 %v1541
  %v1661 = vpop.f32.mrb[0].mxu0
  %v1662 = vadd.f32 %v1569, %v1661
  %v1663 = vpop.f32.mrb[0].mxu0
  %v1664 = vpop.f32.mrb[0].mxu0
  %v1665 = vadd.f32 %v1569, %v1664
  %v1666 = vpop.f32.mrb[0].mxu0
  %1667 = vmatprep.mubr.bf16.mxu0 0
  %1668 = vmatmul.mubr.bf16.gmra.mrb[0].mxu0 %v1542
  %v1669 = vpop.f32.mrb[0].mxu0
  %v1670 = vadd.f32 %v1569, %v1669
  %v1671 = vpop.f32.mrb[0].mxu0
  %v1672 = vpop.f32.mrb[0].mxu0
  %v1673 = vadd.f32 %v1569, %v1672
  %v1674 = vpop.f32.mrb[0].mxu0
  %1675 = vmatprep.mubr.bf16.mxu0 0
  %1676 = vmatmul.mubr.bf16.gmra.mrb[0].mxu0 %v1543
  %v1677 = vpop.f32.mrb[0].mxu0
  %v1678 = vadd.f32 %v1569, %v1677
  %v1679 = vpop.f32.mrb[0].mxu0
  %v1680 = vpop.f32.mrb[0].mxu0
  %v1681 = vadd.f32 %v1569, %v1680
  %v1682 = vpop.f32.mrb[0].mxu0
  %1683 = vmatprep.mubr.bf16.mxu0 0
  %1684 = vmatmul.mubr.bf16.gmra.mrb[0].mxu0 %v1544
  %v1685 = vpop.f32.mrb[0].mxu0
  %v1686 = vadd.f32 %v1569, %v1685
  %v1687 = vpop.f32.mrb[0].mxu0
  %v1688 = vpop.f32.mrb[0].mxu0
  %v1689 = vadd.f32 %v1569, %v1688
  %v1690 = vpop.f32.mrb[0].mxu0
  %1691 = vmatprep.mubr.bf16.mxu0 0
  %1692 = vmatmul.mubr.bf16.gmra.mrb[0].mxu0 %v1545
  %v1693 = vpop.f32.mrb[0].mxu0
  %v1694 = vadd.f32 %v1569, %v1693
  %v1695 = vpop.f32.mrb[0].mxu0
  %v1696 = vpop.f32.mrb[0].mxu0
  %v1697 = vadd.f32 %v1569, %v1696
  %v1698 = vpop.f32.mrb[0].mxu0
  %1699 = vmatprep.mubr.bf16.mxu0 0
  %1700 = vmatmul.mubr.bf16.gmra.mrb[0].mxu0 %v1546
  %v1701 = vpop.f32.mrb[0].mxu0
  %v1702 = vadd.f32 %v1569, %v1701
  %v1703 = vpop.f32.mrb[0].mxu0
  %v1704 = vpop.f32.mrb[0].mxu0
  %v1705 = vadd.f32 %v1569, %v1704
  %v1706 = vpop.f32.mrb[0].mxu0
  %1707 = vmatprep.mubr.bf16.mxu0 0
  %1708 = vmatmul.mubr.bf16.gmra.mrb[0].mxu0 %v1547
  %v1709 = vpop.f32.mrb[0].mxu0
  %v1710 = vadd.f32 %v1569, %v1709
  %v1711 = vpop.f32.mrb[0].mxu0
  %v1712 = vpop.f32.mrb[0].mxu0
  %v1713 = vadd.f32 %v1569, %v1712
  %v1714 = vpop.f32.mrb[0].mxu0
  %1715 = vdwg.mxu0
  %vm1716 = vcmask 97280
  %1717 = vst.msk [vmem:[%s7] sm:$0xff] %vm1716, %v1654
  %1718 = vst.msk [vmem:[%s7 + $0x8] sm:$0xff] %vm1716, %v1657
  %1719 = vst.msk [vmem:[%s7 + $0x10] sm:$0xff] %vm1716, %v1662
  %1720 = vst.msk [vmem:[%s7 + $0x18] sm:$0xff] %vm1716, %v1665
  %1721 = vst.msk [vmem:[%s7 + $0x20] sm:$0xff] %vm1716, %v1670
  %1722 = vst.msk [vmem:[%s7 + $0x28] sm:$0xff] %vm1716, %v1673
  %1723 = vst.msk [vmem:[%s7 + $0x30] sm:$0xff] %vm1716, %v1678
  %1724 = vst.msk [vmem:[%s7 + $0x38] sm:$0xff] %vm1716, %v1681
  %1725 = vst.msk [vmem:[%s7 + $0x40] sm:$0xff] %vm1716, %v1686
  %1726 = vst.msk [vmem:[%s7 + $0x48] sm:$0xff] %vm1716, %v1689
  %1727 = vst.msk [vmem:[%s7 + $0x50] sm:$0xff] %vm1716, %v1694
  %1728 = vst.msk [vmem:[%s7 + $0x58] sm:$0xff] %vm1716, %v1697
  %1729 = vst.msk [vmem:[%s7 + $0x60] sm:$0xff] %vm1716, %v1702
  %1730 = vst.msk [vmem:[%s7 + $0x68] sm:$0xff] %vm1716, %v1705
  %1731 = vst.msk [vmem:[%s7 + $0x70] sm:$0xff] %vm1716, %v1710
  %1732 = vst.msk [vmem:[%s7 + $0x78] sm:$0xff] %vm1716, %v1713
  // Predicated region
  $region30: #{tpu_custom_call.1} parent=0 // pred_check
    _
  $region31: #{tpu_custom_call.1} parent=0 // pred_check_branch
    %1734 = sbr.rel (0) target = $region33
  $region32: #{tpu_custom_call.1} parent=0 // pred_region
    _
  $region33: #{tpu_custom_call.1} parent=0 // pred_fallthru
    _
  // Predicated region
  $region34: #{tpu_custom_call.1} parent=0 // pred_check
    _
  $region35: #{tpu_custom_call.1} parent=0 // pred_check_branch
    %1736 = sbr.rel (0) target = $region37
  $region36: #{tpu_custom_call.1} parent=0 // pred_region
    _
  $region37: #{tpu_custom_call.1} parent=0 // pred_fallthru
    _

</llo_original>
